<compile_context>
chip_gen: v7x
topology: tpu7x:2x2x1
jax: 0.10.0
libtpu: 0.0.40
codegen_flags: <defaults>
</compile_context>

<pallas_src>
import numpy as np
import jax
import jax.numpy as jnp
from jax.experimental import pallas as pl
from jax.experimental.pallas import tpu as pltpu  # noqa: F401  (TPU backend import)

# ---------------- problem sizes ----------------
N_NODES = 8          # number of nodes
N_EDGES = 256        # number of edges
U = 16               # in_irreps dim  ("16x0e")
V = 4                # sh_irreps dim  ("4x0e")
W_OUT = 32           # out_irreps dim ("32x0e")
F_EDGE = 8           # n_edge_features
HID = F_EDGE         # hidden_features defaults to n_edge_features
WEIGHT_NUMEL = U * V * W_OUT
PATH_NORM = 1.0 / np.sqrt(U * V)   # e3nn path normalization for the single 0e x 0e -> 0e path


def _tpconv_kernel(outer_ref, ea_ref, w1_ref, b1_ref, w2r_ref, b2r_ref,
                   s_ref, res_ref, out_ref):
    """Single shot: fc1 -> MXU bilinear tensor product -> scatter-mean matmul + residual."""
    # fc1: Linear -> ReLU (Dropout p=0 is identity). Tiny matmul, kept as latency filler.
    h = jnp.dot(ea_ref[...], w1_ref[...], preferred_element_type=jnp.float32) + b1_ref[...]
    h = jnp.maximum(h, 0.0)                                                 # (E, HID)

    outer = outer_ref[...]                                                  # (E, U*V)
    # Contract the (u,v) axis on the MXU (K = 64). PATH_NORM is folded into W2r / B2r.
    g = jnp.dot(outer, w2r_ref[...], preferred_element_type=jnp.float32)    # (E, HID*W_OUT)
    tp = jnp.dot(outer, b2r_ref[...], preferred_element_type=jnp.float32)   # (E, W_OUT) bias term
    # Remaining hidden-dim contraction: 8 unrolled VPU FMAs on (E, W_OUT) slabs.
    for k in range(HID):
        tp = tp + h[:, k:k + 1] * g[:, k * W_OUT:(k + 1) * W_OUT]

    # scatter(reduce='mean') as a dense averaging-matrix matmul, fused with the residual.
    out_ref[...] = res_ref[...] + jnp.dot(s_ref[...], tp, preferred_element_type=jnp.float32)


def tensor_product_conv_forward(node_attr, edge_index, edge_attr, edge_sh, params):
    """Matches the PyTorch forward with residual=True, batch_norm=False, dropout=0.0,
    reduce='mean', out_nodes=None."""
    W1, b1, W2, b2 = params
    n_nodes = node_attr.shape[0]
    n_edges = edge_attr.shape[0]
    edge_src, edge_dst = edge_index[0], edge_index[1]

    # Glue: gather destination-node features and form the lane-contiguous outer product.
    x1 = node_attr[edge_dst]                                                # (E, U)
    outer = (x1[:, :, None] * edge_sh[:, None, :]).reshape(n_edges, U * V)  # (E, U*V)

    # Glue: pre-permute fc2 weights so the (u,v) contraction is a single MXU matmul.
    W2r = (PATH_NORM * jnp.transpose(W2.reshape(HID, U * V, W_OUT), (1, 0, 2))
           ).reshape(U * V, HID * W_OUT)                                    # (U*V, HID*W_OUT)
    B2r = PATH_NORM * b2.reshape(U * V, W_OUT)                              # (U*V, W_OUT)

    # Glue: scatter-mean as averaging matrix S[n, e] = 1[src[e]==n] / max(count[n], 1).
    one_hot = jax.nn.one_hot(edge_src, n_nodes, dtype=jnp.float32)          # (E, N)
    counts = jnp.sum(one_hot, axis=0)                                       # (N,)
    S = one_hot.T / jnp.clip(counts, 1.0)[:, None]                          # (N, E)

    # Glue: residual pad(node_attr) to output width.
    resid = jnp.pad(node_attr, ((0, 0), (0, W_OUT - node_attr.shape[-1])))  # (N, W_OUT)

    # Single-shot pallas_call (no grid): all operands live whole in VMEM (< 0.5 MiB f32),
    # so there is no pipeline/accumulator overhead and no remainder-tile hazard.
    # TODO(synk): for much larger edge counts, tile the edge axis (TE up to ~4-8K fits
    # v7x's 64 MiB VMEM with this formulation) and split across TCs with per-core
    # partial (N, W_OUT) outputs summed in the wrapper.
    out = pl.pallas_call(
        _tpconv_kernel,
        out_shape=jax.ShapeDtypeStruct((n_nodes, W_OUT), jnp.float32),
    )(outer, edge_attr, W1, b1.reshape(1, -1), W2r, B2r, S, resid)
    return out


def reference_forward(node_attr, edge_index, edge_attr, edge_sh, params):
    """Pure-JAX reference (mirrors the PyTorch semantics)."""
    W1, b1, W2, b2 = params
    n_nodes = node_attr.shape[0]
    src, dst = edge_index[0], edge_index[1]
    x1 = node_attr[dst]
    h = jax.nn.relu(edge_attr @ W1 + b1)
    w = (h @ W2 + b2).reshape(-1, U, V, W_OUT)
    tp = PATH_NORM * jnp.einsum('eu,ev,euvw->ew', x1, edge_sh, w)
    summed = jnp.zeros((n_nodes, W_OUT), jnp.float32).at[src].add(tp)
    counts = jnp.zeros((n_nodes,), jnp.float32).at[src].add(1.0)
    out = summed / jnp.clip(counts, 1.0)[:, None]
    resid = jnp.pad(node_attr, ((0, 0), (0, W_OUT - node_attr.shape[-1])))
    return out + resid


if __name__ == "__main__":
    key = jax.random.PRNGKey(0)
    k = jax.random.split(key, 8)

    # Deterministic parameter init (fc: Linear(F,H) -> ReLU -> Linear(H, weight_numel)).
    W1 = jax.random.normal(k[0], (F_EDGE, HID), jnp.float32) * 0.3
    b1 = jax.random.normal(k[1], (HID,), jnp.float32) * 0.05
    W2 = jax.random.normal(k[2], (HID, WEIGHT_NUMEL), jnp.float32) * 0.1
    b2 = jax.random.normal(k[3], (WEIGHT_NUMEL,), jnp.float32) * 0.05
    params = (W1, b1, W2, b2)

    # Deterministic inputs.
    node_attr = jax.random.normal(k[4], (N_NODES, U), jnp.float32)
    edge_attr = jax.random.normal(k[5], (N_EDGES, F_EDGE), jnp.float32)
    edge_sh = jax.random.normal(k[6], (N_EDGES, V), jnp.float32)
    edge_index = jax.random.randint(k[7], (2, N_EDGES), 0, N_NODES, dtype=jnp.int32)

    out = tensor_product_conv_forward(node_attr, edge_index, edge_attr, edge_sh, params)
    out = jax.block_until_ready(out)

    ref = reference_forward(node_attr, edge_index, edge_attr, edge_sh, params)
    np.testing.assert_allclose(np.asarray(out), np.asarray(ref), rtol=1e-4, atol=1e-4)

    print("KERNEL_OK")
</pallas_src>

<mosaic_0001>
module attributes {stable_mosaic.version = 11 : i64} {
  func.func @_tpconv_kernel(%arg0: memref<256x64xf32, #tpu.memory_space<vmem>>, %arg1: memref<256x8xf32, #tpu.memory_space<vmem>>, %arg2: memref<8x8xf32, #tpu.memory_space<vmem>>, %arg3: memref<1x8xf32, #tpu.memory_space<vmem>>, %arg4: memref<64x256xf32, #tpu.memory_space<vmem>>, %arg5: memref<64x32xf32, #tpu.memory_space<vmem>>, %arg6: memref<8x256xf32, #tpu.memory_space<vmem>>, %arg7: memref<8x32xf32, #tpu.memory_space<vmem>>, %arg8: memref<8x32xf32, #tpu.memory_space<vmem>>) attributes {dimension_semantics = [], scalar_prefetch = 0 : i64, scratch_operands = 0 : i64, tpu.core_type = #tpu.core_type<tc>} {
    %c0 = arith.constant 0 : index
    %c0_0 = arith.constant 0 : index
    %0 = vector.load %arg1[%c0, %c0_0] : memref<256x8xf32, #tpu.memory_space<vmem>>, vector<256x8xf32>
    %c0_1 = arith.constant 0 : index
    %c0_2 = arith.constant 0 : index
    %1 = vector.load %arg2[%c0_1, %c0_2] : memref<8x8xf32, #tpu.memory_space<vmem>>, vector<8x8xf32>
    %cst = arith.constant dense<0.000000e+00> : vector<256x8xf32>
    %2 = tpu.matmul %0, %1, %cst {dimension_numbers = #tpu.dot_dimension_numbers<[1], [0], [0], [1], [0, 0, 1, 1], [], []>} : vector<256x8xf32>, vector<8x8xf32>, vector<256x8xf32> -> vector<256x8xf32>
    %c0_3 = arith.constant 0 : index
    %c0_4 = arith.constant 0 : index
    %3 = vector.load %arg3[%c0_3, %c0_4] : memref<1x8xf32, #tpu.memory_space<vmem>>, vector<1x8xf32>
    %4 = vector.broadcast %3 : vector<1x8xf32> to vector<256x8xf32>
    %5 = arith.addf %2, %4 : vector<256x8xf32>
    %cst_5 = arith.constant 0.000000e+00 : f32
    %6 = vector.broadcast %cst_5 : f32 to vector<256x8xf32>
    %7 = arith.maximumf %5, %6 : vector<256x8xf32>
    %c0_6 = arith.constant 0 : index
    %c0_7 = arith.constant 0 : index
    %8 = vector.load %arg0[%c0_6, %c0_7] : memref<256x64xf32, #tpu.memory_space<vmem>>, vector<256x64xf32>
    %c0_8 = arith.constant 0 : index
    %c0_9 = arith.constant 0 : index
    %9 = vector.load %arg4[%c0_8, %c0_9] : memref<64x256xf32, #tpu.memory_space<vmem>>, vector<64x256xf32>
    %cst_10 = arith.constant dense<0.000000e+00> : vector<256x256xf32>
    %10 = tpu.matmul %8, %9, %cst_10 {dimension_numbers = #tpu.dot_dimension_numbers<[1], [0], [0], [1], [0, 0, 1, 1], [], []>} : vector<256x64xf32>, vector<64x256xf32>, vector<256x256xf32> -> vector<256x256xf32>
    %c0_11 = arith.constant 0 : index
    %c0_12 = arith.constant 0 : index
    %11 = vector.load %arg5[%c0_11, %c0_12] : memref<64x32xf32, #tpu.memory_space<vmem>>, vector<64x32xf32>
    %cst_13 = arith.constant dense<0.000000e+00> : vector<256x32xf32>
    %12 = tpu.matmul %8, %11, %cst_13 {dimension_numbers = #tpu.dot_dimension_numbers<[1], [0], [0], [1], [0, 0, 1, 1], [], []>} : vector<256x64xf32>, vector<64x32xf32>, vector<256x32xf32> -> vector<256x32xf32>
    %13 = vector.extract_strided_slice %7 {offsets = [0, 0], sizes = [256, 1], strides = [1, 1]} : vector<256x8xf32> to vector<256x1xf32>
    %14 = vector.extract_strided_slice %10 {offsets = [0, 0], sizes = [256, 32], strides = [1, 1]} : vector<256x256xf32> to vector<256x32xf32>
    %15 = vector.broadcast %13 : vector<256x1xf32> to vector<256x32xf32>
    %16 = arith.mulf %15, %14 : vector<256x32xf32>
    %17 = arith.addf %12, %16 : vector<256x32xf32>
    %18 = vector.extract_strided_slice %7 {offsets = [0, 1], sizes = [256, 1], strides = [1, 1]} : vector<256x8xf32> to vector<256x1xf32>
    %19 = vector.extract_strided_slice %10 {offsets = [0, 32], sizes = [256, 32], strides = [1, 1]} : vector<256x256xf32> to vector<256x32xf32>
    %20 = vector.broadcast %18 : vector<256x1xf32> to vector<256x32xf32>
    %21 = arith.mulf %20, %19 : vector<256x32xf32>
    %22 = arith.addf %17, %21 : vector<256x32xf32>
    %23 = vector.extract_strided_slice %7 {offsets = [0, 2], sizes = [256, 1], strides = [1, 1]} : vector<256x8xf32> to vector<256x1xf32>
    %24 = vector.extract_strided_slice %10 {offsets = [0, 64], sizes = [256, 32], strides = [1, 1]} : vector<256x256xf32> to vector<256x32xf32>
    %25 = vector.broadcast %23 : vector<256x1xf32> to vector<256x32xf32>
    %26 = arith.mulf %25, %24 : vector<256x32xf32>
    %27 = arith.addf %22, %26 : vector<256x32xf32>
    %28 = vector.extract_strided_slice %7 {offsets = [0, 3], sizes = [256, 1], strides = [1, 1]} : vector<256x8xf32> to vector<256x1xf32>
    %29 = vector.extract_strided_slice %10 {offsets = [0, 96], sizes = [256, 32], strides = [1, 1]} : vector<256x256xf32> to vector<256x32xf32>
    %30 = vector.broadcast %28 : vector<256x1xf32> to vector<256x32xf32>
    %31 = arith.mulf %30, %29 : vector<256x32xf32>
    %32 = arith.addf %27, %31 : vector<256x32xf32>
    %33 = vector.extract_strided_slice %7 {offsets = [0, 4], sizes = [256, 1], strides = [1, 1]} : vector<256x8xf32> to vector<256x1xf32>
    %34 = vector.extract_strided_slice %10 {offsets = [0, 128], sizes = [256, 32], strides = [1, 1]} : vector<256x256xf32> to vector<256x32xf32>
    %35 = vector.broadcast %33 : vector<256x1xf32> to vector<256x32xf32>
    %36 = arith.mulf %35, %34 : vector<256x32xf32>
    %37 = arith.addf %32, %36 : vector<256x32xf32>
    %38 = vector.extract_strided_slice %7 {offsets = [0, 5], sizes = [256, 1], strides = [1, 1]} : vector<256x8xf32> to vector<256x1xf32>
    %39 = vector.extract_strided_slice %10 {offsets = [0, 160], sizes = [256, 32], strides = [1, 1]} : vector<256x256xf32> to vector<256x32xf32>
    %40 = vector.broadcast %38 : vector<256x1xf32> to vector<256x32xf32>
    %41 = arith.mulf %40, %39 : vector<256x32xf32>
    %42 = arith.addf %37, %41 : vector<256x32xf32>
    %43 = vector.extract_strided_slice %7 {offsets = [0, 6], sizes = [256, 1], strides = [1, 1]} : vector<256x8xf32> to vector<256x1xf32>
    %44 = vector.extract_strided_slice %10 {offsets = [0, 192], sizes = [256, 32], strides = [1, 1]} : vector<256x256xf32> to vector<256x32xf32>
    %45 = vector.broadcast %43 : vector<256x1xf32> to vector<256x32xf32>
    %46 = arith.mulf %45, %44 : vector<256x32xf32>
    %47 = arith.addf %42, %46 : vector<256x32xf32>
    %48 = vector.extract_strided_slice %7 {offsets = [0, 7], sizes = [256, 1], strides = [1, 1]} : vector<256x8xf32> to vector<256x1xf32>
    %49 = vector.extract_strided_slice %10 {offsets = [0, 224], sizes = [256, 32], strides = [1, 1]} : vector<256x256xf32> to vector<256x32xf32>
    %50 = vector.broadcast %48 : vector<256x1xf32> to vector<256x32xf32>
    %51 = arith.mulf %50, %49 : vector<256x32xf32>
    %52 = arith.addf %47, %51 : vector<256x32xf32>
    %c0_14 = arith.constant 0 : index
    %c0_15 = arith.constant 0 : index
    %53 = vector.load %arg7[%c0_14, %c0_15] : memref<8x32xf32, #tpu.memory_space<vmem>>, vector<8x32xf32>
    %c0_16 = arith.constant 0 : index
    %c0_17 = arith.constant 0 : index
    %54 = vector.load %arg6[%c0_16, %c0_17] : memref<8x256xf32, #tpu.memory_space<vmem>>, vector<8x256xf32>
    %cst_18 = arith.constant dense<0.000000e+00> : vector<8x32xf32>
    %55 = tpu.matmul %54, %52, %cst_18 {dimension_numbers = #tpu.dot_dimension_numbers<[1], [0], [0], [1], [0, 0, 1, 1], [], []>} : vector<8x256xf32>, vector<256x32xf32>, vector<8x32xf32> -> vector<8x32xf32>
    %56 = arith.addf %53, %55 : vector<8x32xf32>
    %c0_19 = arith.constant 0 : index
    %c0_20 = arith.constant 0 : index
    %57 = vector.load %arg8[%c0_19, %c0_20] : memref<8x32xf32, #tpu.memory_space<vmem>>, vector<8x32xf32>
    tpu.vector_store %arg8[%c0_19, %c0_20], %56 {strides = array<i32>} : memref<8x32xf32, #tpu.memory_space<vmem>>, vector<8x32xf32>,
    return
  }
}

</mosaic_0001>

<llo_original>
// kernel: tpu_custom_call.1
$region0: #{tpu_custom_call.1}
  #allocation0 [shape = 'u32[]', space=smem, size = 0x4, offset = 0x4, fixed_abs, tag = 'smem constant byte address 0x4 - core index']
  #allocation1 [shape = 'u32[144,128]{1,0:T(1,128)}', space=vmem, size = 0x12000, scoped, tag = 'internal scratch']
  %s0 = inlined_call_operand.vmem [shape: f32[256,64], index: 0, kind: input, shape index: {}]
  %s1 = inlined_call_operand.vmem [shape: f32[256,8], index: 1, kind: input, shape index: {}]
  %s2 = inlined_call_operand.vmem [shape: f32[8,8], index: 2, kind: input, shape index: {}]
  %s3 = inlined_call_operand.vmem [shape: f32[1,8], index: 3, kind: input, shape index: {}]
  %s4 = inlined_call_operand.vmem [shape: f32[64,256], index: 4, kind: input, shape index: {}]
  %s5 = inlined_call_operand.vmem [shape: f32[64,32], index: 5, kind: input, shape index: {}]
  %s6 = inlined_call_operand.vmem [shape: f32[8,256], index: 6, kind: input, shape index: {}]
  %s7 = inlined_call_operand.vmem [shape: f32[8,32], index: 7, kind: input, shape index: {}]
  %s8 = inlined_call_operand.hbm [shape: f32[8,32], index: 8, kind: output, shape index: {}]
  %s9 = sld [smem:[#allocation0]]
  $region42: #{tpu_custom_call.1} parent=0
    _
  %s11 = ssub.s32 1, %s9
  %s12 = scalar_select 0, %s11, %s9
  $region1: #{tpu_custom_call.1} parent=0
    #allocation2 [shape = 'u8[4096]{0}', space=vmem, size = 0x1000, scoped, tag = 'output window, operand 0, single buffered']
    #allocation3 [shape = 's32[1]{0}', space=sflag, size = 0x4, scoped, tag = 'scoped memory for tpu_custom_call.1']
    %13 = vsyncpa [#allocation3], 0
    // Predicated region
    $region2: #{tpu_custom_call.1} parent=1 // pred_check
      _
    $region3: #{tpu_custom_call.1} parent=1 // pred_check_branch
      %15 = sbr.rel (0) target = $region5
    $region4: #{tpu_custom_call.1} parent=1 // pred_region
      _
    $region5: #{tpu_custom_call.1} parent=1 // pred_fallthru
      _
    // Predicated region
    $region6: #{tpu_custom_call.1} parent=1 // pred_check
      _
    $region7: #{tpu_custom_call.1} parent=1 // pred_check_branch
      %17 = sbr.rel (0) target = $region9
    $region8: #{tpu_custom_call.1} parent=1 // pred_region
      _
    $region9: #{tpu_custom_call.1} parent=1 // pred_fallthru
      _
    // Predicated region
    $region10: #{tpu_custom_call.1} parent=1 // pred_check
      _
    $region11: #{tpu_custom_call.1} parent=1 // pred_check_branch
      %19 = sbr.rel (0) target = $region13
    $region12: #{tpu_custom_call.1} parent=1 // pred_region
      _
    $region13: #{tpu_custom_call.1} parent=1 // pred_fallthru
      _
    // Predicated region
    $region14: #{tpu_custom_call.1} parent=1 // pred_check
      _
    $region15: #{tpu_custom_call.1} parent=1 // pred_check_branch
      %21 = sbr.rel (0) target = $region17
    $region16: #{tpu_custom_call.1} parent=1 // pred_region
      _
    $region17: #{tpu_custom_call.1} parent=1 // pred_fallthru
      _
    // Predicated region
    $region18: #{tpu_custom_call.1} parent=1 // pred_check
      _
    $region19: #{tpu_custom_call.1} parent=1 // pred_check_branch
      %23 = sbr.rel (0) target = $region21
    $region20: #{tpu_custom_call.1} parent=1 // pred_region
      _
    $region21: #{tpu_custom_call.1} parent=1 // pred_fallthru
      _
    // Predicated region
    $region22: #{tpu_custom_call.1} parent=1 // pred_check
      _
    $region23: #{tpu_custom_call.1} parent=1 // pred_check_branch
      %25 = sbr.rel (0) target = $region25
    $region24: #{tpu_custom_call.1} parent=1 // pred_region
      _
    $region25: #{tpu_custom_call.1} parent=1 // pred_fallthru
      _
    // Predicated region
    $region26: #{tpu_custom_call.1} parent=1 // pred_check
      _
    $region27: #{tpu_custom_call.1} parent=1 // pred_check_branch
      %27 = sbr.rel (0) target = $region29
    $region28: #{tpu_custom_call.1} parent=1 // pred_region
      _
    $region29: #{tpu_custom_call.1} parent=1 // pred_fallthru
      _
    // Predicated region
    $region30: #{tpu_custom_call.1} parent=1 // pred_check
      _
    $region31: #{tpu_custom_call.1} parent=1 // pred_check_branch
      %29 = sbr.rel (0) target = $region33
    $region32: #{tpu_custom_call.1} parent=1 // pred_region
      _
    $region33: #{tpu_custom_call.1} parent=1 // pred_fallthru
      _
    %v30 = vld [vmem:[%s1] sm:$0xff]
    %v31 = vld [vmem:[%s1 + $0x8] sm:$0xff]
    %v32 = vld [vmem:[%s1 + $0x10] sm:$0xff]
    %v33 = vld [vmem:[%s1 + $0x18] sm:$0xff]
    %v34 = vld [vmem:[%s1 + $0x20] sm:$0xff]
    %v35 = vld [vmem:[%s1 + $0x28] sm:$0xff]
    %v36 = vld [vmem:[%s1 + $0x30] sm:$0xff]
    %v37 = vld [vmem:[%s1 + $0x38] sm:$0xff]
    %v38 = vld [vmem:[%s1 + $0x40] sm:$0xff]
    %v39 = vld [vmem:[%s1 + $0x48] sm:$0xff]
    %v40 = vld [vmem:[%s1 + $0x50] sm:$0xff]
    %v41 = vld [vmem:[%s1 + $0x58] sm:$0xff]
    %v42 = vld [vmem:[%s1 + $0x60] sm:$0xff]
    %v43 = vld [vmem:[%s1 + $0x68] sm:$0xff]
    %v44 = vld [vmem:[%s1 + $0x70] sm:$0xff]
    %v45 = vld [vmem:[%s1 + $0x78] sm:$0xff]
    %v46 = vld [vmem:[%s1 + $0x80] sm:$0xff]
    %v47 = vld [vmem:[%s1 + $0x88] sm:$0xff]
    %v48 = vld [vmem:[%s1 + $0x90] sm:$0xff]
    %v49 = vld [vmem:[%s1 + $0x98] sm:$0xff]
    %v50 = vld [vmem:[%s1 + $0xa0] sm:$0xff]
    %v51 = vld [vmem:[%s1 + $0xa8] sm:$0xff]
    %v52 = vld [vmem:[%s1 + $0xb0] sm:$0xff]
    %v53 = vld [vmem:[%s1 + $0xb8] sm:$0xff]
    %v54 = vld [vmem:[%s1 + $0xc0] sm:$0xff]
    %v55 = vld [vmem:[%s1 + $0xc8] sm:$0xff]
    %v56 = vld [vmem:[%s1 + $0xd0] sm:$0xff]
    %v57 = vld [vmem:[%s1 + $0xd8] sm:$0xff]
    %v58 = vld [vmem:[%s1 + $0xe0] sm:$0xff]
    %v59 = vld [vmem:[%s1 + $0xe8] sm:$0xff]
    %v60 = vld [vmem:[%s1 + $0xf0] sm:$0xff]
    %v61 = vld [vmem:[%s1 + $0xf8] sm:$0xff]
    %v62 = vld [vmem:[%s2] sm:$0xff]
    %v63 = vld [vmem:[%s3] sm:$0x1]
    %v65 = vlaneseq
    %v66 = vshrl.u32 %v65, 7
    %v67 = vsub.s32 0, %v66
    %v68 = vrot.slane %v63, %v67
    %vm70 = vcmask 64512
    %v72 = vsel %vm70, %v30, 0
    %v75 = vsel %vm70, %v31, 0
    %v78 = vsel %vm70, %v32, 0
    %v81 = vsel %vm70, %v33, 0
    %v84 = vsel %vm70, %v34, 0
    %v87 = vsel %vm70, %v35, 0
    %v90 = vsel %vm70, %v36, 0
    %v93 = vsel %vm70, %v37, 0
    %v96 = vsel %vm70, %v38, 0
    %v99 = vsel %vm70, %v39, 0
    %v102 = vsel %vm70, %v40, 0
    %v105 = vsel %vm70, %v41, 0
    %v108 = vsel %vm70, %v42, 0
    %v111 = vsel %vm70, %v43, 0
    %v114 = vsel %vm70, %v44, 0
    %v117 = vsel %vm70, %v45, 0
    %v120 = vsel %vm70, %v46, 0
    %v123 = vsel %vm70, %v47, 0
    %v126 = vsel %vm70, %v48, 0
    %v129 = vsel %vm70, %v49, 0
    %v132 = vsel %vm70, %v50, 0
    %v135 = vsel %vm70, %v51, 0
    %v138 = vsel %vm70, %v52, 0
    %v141 = vsel %vm70, %v53, 0
    %v144 = vsel %vm70, %v54, 0
    %v147 = vsel %vm70, %v55, 0
    %v150 = vsel %vm70, %v56, 0
    %v153 = vsel %vm70, %v57, 0
    %v156 = vsel %vm70, %v58, 0
    %v159 = vsel %vm70, %v59, 0
    %v162 = vsel %vm70, %v60, 0
    %v165 = vsel %vm70, %v61, 0
    %167 = vmatprep.subr.mxu0 0.0
    %168 = vmatpush1.msra.mxu0 %v62
    %169 = vmatprep.subr.mxu0 0.0
    %170 = vmatpush1.msra.mxu0 0.0
    %171 = vmatprep.subr.mxu0 0.0
    %172 = vmatpush1.msra.mxu0 0.0
    %173 = vmatprep.subr.mxu0 0.0
    %174 = vmatpush1.msra.mxu0 0.0
    %175 = vmatprep.subr.mxu0 0.0
    %176 = vmatpush1.msra.mxu0 0.0
    %177 = vmatprep.subr.mxu0 0.0
    %178 = vmatpush1.msra.mxu0 0.0
    %179 = vmatprep.subr.mxu0 0.0
    %180 = vmatpush1.msra.mxu0 0.0
    %181 = vmatprep.subr.mxu0 0.0
    %182 = vmatpush1.msra.mxu0 0.0
    %183 = vmatprep.subr.mxu0 0.0
    %184 = vmatpush1.msra.mxu0 0.0
    %185 = vmatprep.subr.mxu0 0.0
    %186 = vmatpush1.msra.mxu0 0.0
    %187 = vmatprep.subr.mxu0 0.0
    %188 = vmatpush1.msra.mxu0 0.0
    %189 = vmatprep.subr.mxu0 0.0
    %190 = vmatpush1.msra.mxu0 0.0
    %191 = vmatprep.subr.mxu0 0.0
    %192 = vmatpush1.msra.mxu0 0.0
    %193 = vmatprep.subr.mxu0 0.0
    %194 = vmatpush1.msra.mxu0 0.0
    %195 = vmatprep.subr.mxu0 0.0
    %196 = vmatpush1.msra.mxu0 0.0
    %197 = vmatprep.subr.mxu0 0.0
    %198 = vmatpush1.msra.mxu0 0.0
    %199 = vmatprep.subr.mxu0 0.0
    %200 = vmatpush1.msra.mxu0 0.0
    %201 = vmatprep.subr.mxu0 0.0
    %202 = vmatpush1.msra.mxu0 0.0
    %203 = vmatprep.subr.mxu0 0.0
    %204 = vmatpush1.msra.mxu0 0.0
    %205 = vmatprep.subr.mxu0 0.0
    %206 = vmatpush1.msra.mxu0 0.0
    %207 = vmatprep.subr.mxu0 0.0
    %208 = vmatpush1.msra.mxu0 0.0
    %209 = vmatprep.subr.mxu0 0.0
    %210 = vmatpush1.msra.mxu0 0.0
    %211 = vmatprep.subr.mxu0 0.0
    %212 = vmatpush1.msra.mxu0 0.0
    %213 = vmatprep.subr.mxu0 0.0
    %214 = vmatpush1.msra.mxu0 0.0
    %215 = vmatprep.subr.mxu0 0.0
    %216 = vmatpush1.msra.mxu0 0.0
    %217 = vmatprep.subr.mxu0 0.0
    %218 = vmatpush1.msra.mxu0 0.0
    %219 = vmatprep.subr.mxu0 0.0
    %220 = vmatpush1.msra.mxu0 0.0
    %221 = vmatprep.subr.mxu0 0.0
    %222 = vmatpush1.msra.mxu0 0.0
    %223 = vmatprep.subr.mxu0 0.0
    %224 = vmatpush1.msra.mxu0 0.0
    %225 = vmatprep.subr.mxu0 0.0
    %226 = vmatpush1.msra.mxu0 0.0
    %227 = vmatprep.subr.mxu0 0.0
    %228 = vmatpush1.msra.mxu0 0.0
    %229 = vmatprep.subr.mxu0 0.0
    %230 = vmatpush1.msra.mxu0 0.0
    %231 = vmatprep.mubr.f32.mxu0 0.0
    %232 = vmatmul.mubr.f32.gmra.mrb[0].mxu0 %v72
    %v233 = vpop.f32.mrb[0].mxu0
    %v234 = vadd.f32 %v68, %v233
    %v235 = vpop.f32.mrb[0].mxu0
    %236 = vmatprep.mubr.f32.mxu0 0.0
    %237 = vmatmul.mubr.f32.gmra.mrb[0].mxu0 %v75
    %v238 = vpop.f32.mrb[0].mxu0
    %v239 = vadd.f32 %v68, %v238
    %v240 = vpop.f32.mrb[0].mxu0
    %241 = vmatprep.mubr.f32.mxu0 0.0
    %242 = vmatmul.mubr.f32.gmra.mrb[0].mxu0 %v78
    %v243 = vpop.f32.mrb[0].mxu0
    %v244 = vadd.f32 %v68, %v243
    %v245 = vpop.f32.mrb[0].mxu0
    %246 = vmatprep.mubr.f32.mxu0 0.0
    %247 = vmatmul.mubr.f32.gmra.mrb[0].mxu0 %v81
    %v248 = vpop.f32.mrb[0].mxu0
    %v249 = vadd.f32 %v68, %v248
    %v250 = vpop.f32.mrb[0].mxu0
    %251 = vmatprep.mubr.f32.mxu0 0.0
    %252 = vmatmul.mubr.f32.gmra.mrb[0].mxu0 %v84
    %v253 = vpop.f32.mrb[0].mxu0
    %v254 = vadd.f32 %v68, %v253
    %v255 = vpop.f32.mrb[0].mxu0
    %256 = vmatprep.mubr.f32.mxu0 0.0
    %257 = vmatmul.mubr.f32.gmra.mrb[0].mxu0 %v87
    %v258 = vpop.f32.mrb[0].mxu0
    %v259 = vadd.f32 %v68, %v258
    %v260 = vpop.f32.mrb[0].mxu0
    %261 = vmatprep.mubr.f32.mxu0 0.0
    %262 = vmatmul.mubr.f32.gmra.mrb[0].mxu0 %v90
    %v263 = vpop.f32.mrb[0].mxu0
    %v264 = vadd.f32 %v68, %v263
    %v265 = vpop.f32.mrb[0].mxu0
    %266 = vmatprep.mubr.f32.mxu0 0.0
    %267 = vmatmul.mubr.f32.gmra.mrb[0].mxu0 %v93
    %v268 = vpop.f32.mrb[0].mxu0
    %v269 = vadd.f32 %v68, %v268
    %v270 = vpop.f32.mrb[0].mxu0
    %271 = vmatprep.mubr.f32.mxu0 0.0
    %272 = vmatmul.mubr.f32.gmra.mrb[0].mxu0 %v96
    %v273 = vpop.f32.mrb[0].mxu0
    %v274 = vadd.f32 %v68, %v273
    %v275 = vpop.f32.mrb[0].mxu0
    %276 = vmatprep.mubr.f32.mxu0 0.0
    %277 = vmatmul.mubr.f32.gmra.mrb[0].mxu0 %v99
    %v278 = vpop.f32.mrb[0].mxu0
    %v279 = vadd.f32 %v68, %v278
    %v280 = vpop.f32.mrb[0].mxu0
    %281 = vmatprep.mubr.f32.mxu0 0.0
    %282 = vmatmul.mubr.f32.gmra.mrb[0].mxu0 %v102
    %v283 = vpop.f32.mrb[0].mxu0
    %v284 = vadd.f32 %v68, %v283
    %v285 = vpop.f32.mrb[0].mxu0
    %286 = vmatprep.mubr.f32.mxu0 0.0
    %287 = vmatmul.mubr.f32.gmra.mrb[0].mxu0 %v105
    %v288 = vpop.f32.mrb[0].mxu0
    %v289 = vadd.f32 %v68, %v288
    %v290 = vpop.f32.mrb[0].mxu0
    %291 = vmatprep.mubr.f32.mxu0 0.0
    %292 = vmatmul.mubr.f32.gmra.mrb[0].mxu0 %v108
    %v293 = vpop.f32.mrb[0].mxu0
    %v294 = vadd.f32 %v68, %v293
    %v295 = vpop.f32.mrb[0].mxu0
    %296 = vmatprep.mubr.f32.mxu0 0.0
    %297 = vmatmul.mubr.f32.gmra.mrb[0].mxu0 %v111
    %v298 = vpop.f32.mrb[0].mxu0
    %v299 = vadd.f32 %v68, %v298
    %v300 = vpop.f32.mrb[0].mxu0
    %301 = vmatprep.mubr.f32.mxu0 0.0
    %302 = vmatmul.mubr.f32.gmra.mrb[0].mxu0 %v114
    %v303 = vpop.f32.mrb[0].mxu0
    %v304 = vadd.f32 %v68, %v303
    %v305 = vpop.f32.mrb[0].mxu0
    %306 = vmatprep.mubr.f32.mxu0 0.0
    %307 = vmatmul.mubr.f32.gmra.mrb[0].mxu0 %v117
    %v308 = vpop.f32.mrb[0].mxu0
    %v309 = vadd.f32 %v68, %v308
    %v310 = vpop.f32.mrb[0].mxu0
    %311 = vmatprep.mubr.f32.mxu0 0.0
    %312 = vmatmul.mubr.f32.gmra.mrb[0].mxu0 %v120
    %v313 = vpop.f32.mrb[0].mxu0
    %v314 = vadd.f32 %v68, %v313
    %v315 = vpop.f32.mrb[0].mxu0
    %316 = vmatprep.mubr.f32.mxu0 0.0
    %317 = vmatmul.mubr.f32.gmra.mrb[0].mxu0 %v123
    %v318 = vpop.f32.mrb[0].mxu0
    %v319 = vadd.f32 %v68, %v318
    %v320 = vpop.f32.mrb[0].mxu0
    %321 = vmatprep.mubr.f32.mxu0 0.0
    %322 = vmatmul.mubr.f32.gmra.mrb[0].mxu0 %v126
    %v323 = vpop.f32.mrb[0].mxu0
    %v324 = vadd.f32 %v68, %v323
    %v325 = vpop.f32.mrb[0].mxu0
    %326 = vmatprep.mubr.f32.mxu0 0.0
    %327 = vmatmul.mubr.f32.gmra.mrb[0].mxu0 %v129
    %v328 = vpop.f32.mrb[0].mxu0
    %v329 = vadd.f32 %v68, %v328
    %v330 = vpop.f32.mrb[0].mxu0
    %331 = vmatprep.mubr.f32.mxu0 0.0
    %332 = vmatmul.mubr.f32.gmra.mrb[0].mxu0 %v132
    %v333 = vpop.f32.mrb[0].mxu0
    %v334 = vadd.f32 %v68, %v333
    %v335 = vpop.f32.mrb[0].mxu0
    %336 = vmatprep.mubr.f32.mxu0 0.0
    %337 = vmatmul.mubr.f32.gmra.mrb[0].mxu0 %v135
    %v338 = vpop.f32.mrb[0].mxu0
    %v339 = vadd.f32 %v68, %v338
    %v340 = vpop.f32.mrb[0].mxu0
    %341 = vmatprep.mubr.f32.mxu0 0.0
    %342 = vmatmul.mubr.f32.gmra.mrb[0].mxu0 %v138
    %v343 = vpop.f32.mrb[0].mxu0
    %v344 = vadd.f32 %v68, %v343
    %v345 = vpop.f32.mrb[0].mxu0
    %346 = vmatprep.mubr.f32.mxu0 0.0
    %347 = vmatmul.mubr.f32.gmra.mrb[0].mxu0 %v141
    %v348 = vpop.f32.mrb[0].mxu0
    %v349 = vadd.f32 %v68, %v348
    %v350 = vpop.f32.mrb[0].mxu0
    %351 = vmatprep.mubr.f32.mxu0 0.0
    %352 = vmatmul.mubr.f32.gmra.mrb[0].mxu0 %v144
    %v353 = vpop.f32.mrb[0].mxu0
    %v354 = vadd.f32 %v68, %v353
    %v355 = vpop.f32.mrb[0].mxu0
    %356 = vmatprep.mubr.f32.mxu0 0.0
    %357 = vmatmul.mubr.f32.gmra.mrb[0].mxu0 %v147
    %v358 = vpop.f32.mrb[0].mxu0
    %v359 = vadd.f32 %v68, %v358
    %v360 = vpop.f32.mrb[0].mxu0
    %361 = vmatprep.mubr.f32.mxu0 0.0
    %362 = vmatmul.mubr.f32.gmra.mrb[0].mxu0 %v150
    %v363 = vpop.f32.mrb[0].mxu0
    %v364 = vadd.f32 %v68, %v363
    %v365 = vpop.f32.mrb[0].mxu0
    %366 = vmatprep.mubr.f32.mxu0 0.0
    %367 = vmatmul.mubr.f32.gmra.mrb[0].mxu0 %v153
    %v368 = vpop.f32.mrb[0].mxu0
    %v369 = vadd.f32 %v68, %v368
    %v370 = vpop.f32.mrb[0].mxu0
    %371 = vmatprep.mubr.f32.mxu0 0.0
    %372 = vmatmul.mubr.f32.gmra.mrb[0].mxu0 %v156
    %v373 = vpop.f32.mrb[0].mxu0
    %v374 = vadd.f32 %v68, %v373
    %v375 = vpop.f32.mrb[0].mxu0
    %376 = vmatprep.mubr.f32.mxu0 0.0
    %377 = vmatmul.mubr.f32.gmra.mrb[0].mxu0 %v159
    %v378 = vpop.f32.mrb[0].mxu0
    %v379 = vadd.f32 %v68, %v378
    %v380 = vpop.f32.mrb[0].mxu0
    %381 = vmatprep.mubr.f32.mxu0 0.0
    %382 = vmatmul.mubr.f32.gmra.mrb[0].mxu0 %v162
    %v383 = vpop.f32.mrb[0].mxu0
    %v384 = vadd.f32 %v68, %v383
    %v385 = vpop.f32.mrb[0].mxu0
    %386 = vmatprep.mubr.f32.mxu0 0.0
    %387 = vmatmul.mubr.f32.gmra.mrb[0].mxu0 %v165
    %v388 = vpop.f32.mrb[0].mxu0
    %v389 = vadd.f32 %v68, %v388
    %v390 = vpop.f32.mrb[0].mxu0
    %391 = vdwg.mxu0
    %v392 = vmax.f32 %v234, 0.0
    %v393 = vmax.f32 %v239, 0.0
    %v394 = vmax.f32 %v244, 0.0
    %v395 = vmax.f32 %v249, 0.0
    %v396 = vmax.f32 %v254, 0.0
    %v397 = vmax.f32 %v259, 0.0
    %v398 = vmax.f32 %v264, 0.0
    %v399 = vmax.f32 %v269, 0.0
    %v400 = vmax.f32 %v274, 0.0
    %v401 = vmax.f32 %v279, 0.0
    %v402 = vmax.f32 %v284, 0.0
    %v403 = vmax.f32 %v289, 0.0
    %v404 = vmax.f32 %v294, 0.0
    %v405 = vmax.f32 %v299, 0.0
    %v406 = vmax.f32 %v304, 0.0
    %v407 = vmax.f32 %v309, 0.0
    %v408 = vmax.f32 %v314, 0.0
    %v409 = vmax.f32 %v319, 0.0
    %v410 = vmax.f32 %v324, 0.0
    %v411 = vmax.f32 %v329, 0.0
    %v412 = vmax.f32 %v334, 0.0
    %v413 = vmax.f32 %v339, 0.0
    %v414 = vmax.f32 %v344, 0.0
    %v415 = vmax.f32 %v349, 0.0
    %v416 = vmax.f32 %v354, 0.0
    %v417 = vmax.f32 %v359, 0.0
    %v418 = vmax.f32 %v364, 0.0
    %v419 = vmax.f32 %v369, 0.0
    %v420 = vmax.f32 %v374, 0.0
    %v421 = vmax.f32 %v379, 0.0
    %v422 = vmax.f32 %v384, 0.0
    %v423 = vmax.f32 %v389, 0.0
    %v424 = vld [vmem:[%s0] sm:$0xff]
    %v425 = vld [vmem:[%s0 + $0x8] sm:$0xff]
    %v426 = vld [vmem:[%s0 + $0x10] sm:$0xff]
    %v427 = vld [vmem:[%s0 + $0x18] sm:$0xff]
    %v428 = vld [vmem:[%s0 + $0x20] sm:$0xff]
    %v429 = vld [vmem:[%s0 + $0x28] sm:$0xff]
    %v430 = vld [vmem:[%s0 + $0x30] sm:$0xff]
    %v431 = vld [vmem:[%s0 + $0x38] sm:$0xff]
    %v432 = vld [vmem:[%s0 + $0x40] sm:$0xff]
    %v433 = vld [vmem:[%s0 + $0x48] sm:$0xff]
    %v434 = vld [vmem:[%s0 + $0x50] sm:$0xff]
    %v435 = vld [vmem:[%s0 + $0x58] sm:$0xff]
    %v436 = vld [vmem:[%s0 + $0x60] sm:$0xff]
    %v437 = vld [vmem:[%s0 + $0x68] sm:$0xff]
    %v438 = vld [vmem:[%s0 + $0x70] sm:$0xff]
    %v439 = vld [vmem:[%s0 + $0x78] sm:$0xff]
    %v440 = vld [vmem:[%s0 + $0x80] sm:$0xff]
    %v441 = vld [vmem:[%s0 + $0x88] sm:$0xff]
    %v442 = vld [vmem:[%s0 + $0x90] sm:$0xff]
    %v443 = vld [vmem:[%s0 + $0x98] sm:$0xff]
    %v444 = vld [vmem:[%s0 + $0xa0] sm:$0xff]
    %v445 = vld [vmem:[%s0 + $0xa8] sm:$0xff]
    %v446 = vld [vmem:[%s0 + $0xb0] sm:$0xff]
    %v447 = vld [vmem:[%s0 + $0xb8] sm:$0xff]
    %v448 = vld [vmem:[%s0 + $0xc0] sm:$0xff]
    %v449 = vld [vmem:[%s0 + $0xc8] sm:$0xff]
    %v450 = vld [vmem:[%s0 + $0xd0] sm:$0xff]
    %v451 = vld [vmem:[%s0 + $0xd8] sm:$0xff]
    %v452 = vld [vmem:[%s0 + $0xe0] sm:$0xff]
    %v453 = vld [vmem:[%s0 + $0xe8] sm:$0xff]
    %v454 = vld [vmem:[%s0 + $0xf0] sm:$0xff]
    %v455 = vld [vmem:[%s0 + $0xf8] sm:$0xff]
    %v456 = vld [vmem:[%s4] sm:$0xff]
    %v457 = vld [vmem:[%s4 + $0x8] sm:$0xff]
    %v458 = vld [vmem:[%s4 + $0x10] sm:$0xff]
    %v459 = vld [vmem:[%s4 + $0x18] sm:$0xff]
    %v460 = vld [vmem:[%s4 + $0x20] sm:$0xff]
    %v461 = vld [vmem:[%s4 + $0x28] sm:$0xff]
    %v462 = vld [vmem:[%s4 + $0x30] sm:$0xff]
    %v463 = vld [vmem:[%s4 + $0x38] sm:$0xff]
    %v464 = vld [vmem:[%s4 + $0x40] sm:$0xff]
    %v465 = vld [vmem:[%s4 + $0x48] sm:$0xff]
    %v466 = vld [vmem:[%s4 + $0x50] sm:$0xff]
    %v467 = vld [vmem:[%s4 + $0x58] sm:$0xff]
    %v468 = vld [vmem:[%s4 + $0x60] sm:$0xff]
    %v469 = vld [vmem:[%s4 + $0x68] sm:$0xff]
    %v470 = vld [vmem:[%s4 + $0x70] sm:$0xff]
    %v471 = vld [vmem:[%s4 + $0x78] sm:$0xff]
    %vm472 = vcmask 523264
    %v474 = vsel %vm472, %v424, 0
    %v477 = vsel %vm472, %v425, 0
    %v480 = vsel %vm472, %v426, 0
    %v483 = vsel %vm472, %v427, 0
    %v486 = vsel %vm472, %v428, 0
    %v489 = vsel %vm472, %v429, 0
    %v492 = vsel %vm472, %v430, 0
    %v495 = vsel %vm472, %v431, 0
    %v498 = vsel %vm472, %v432, 0
    %v501 = vsel %vm472, %v433, 0
    %v504 = vsel %vm472, %v434, 0
    %v507 = vsel %vm472, %v435, 0
    %v510 = vsel %vm472, %v436, 0
    %v513 = vsel %vm472, %v437, 0
    %v516 = vsel %vm472, %v438, 0
    %v519 = vsel %vm472, %v439, 0
    %v522 = vsel %vm472, %v440, 0
    %v525 = vsel %vm472, %v441, 0
    %v528 = vsel %vm472, %v442, 0
    %v531 = vsel %vm472, %v443, 0
    %v534 = vsel %vm472, %v444, 0
    %v537 = vsel %vm472, %v445, 0
    %v540 = vsel %vm472, %v446, 0
    %v543 = vsel %vm472, %v447, 0
    %v546 = vsel %vm472, %v448, 0
    %v549 = vsel %vm472, %v449, 0
    %v552 = vsel %vm472, %v450, 0
    %v555 = vsel %vm472, %v451, 0
    %v558 = vsel %vm472, %v452, 0
    %v561 = vsel %vm472, %v453, 0
    %v564 = vsel %vm472, %v454, 0
    %v567 = vsel %vm472, %v455, 0
    %569 = vmatprep.subr.mxu0 %v457
    %570 = vmatpush1.msra.mxu0 %v456
    %571 = vmatprep.subr.mxu0 %v459
    %572 = vmatpush1.msra.mxu0 %v458
    %573 = vmatprep.subr.mxu0 %v461
    %574 = vmatpush1.msra.mxu0 %v460
    %575 = vmatprep.subr.mxu0 %v463
    %576 = vmatpush1.msra.mxu0 %v462
    %577 = vmatprep.subr.mxu0 %v465
    %578 = vmatpush1.msra.mxu0 %v464
    %579 = vmatprep.subr.mxu0 %v467
    %580 = vmatpush1.msra.mxu0 %v466
    %581 = vmatprep.subr.mxu0 %v469
    %582 = vmatpush1.msra.mxu0 %v468
    %583 = vmatprep.subr.mxu0 %v471
    %584 = vmatpush1.msra.mxu0 %v470
    %585 = vmatprep.subr.mxu0 0.0
    %586 = vmatpush1.msra.mxu0 0.0
    %587 = vmatprep.subr.mxu0 0.0
    %588 = vmatpush1.msra.mxu0 0.0
    %589 = vmatprep.subr.mxu0 0.0
    %590 = vmatpush1.msra.mxu0 0.0
    %591 = vmatprep.subr.mxu0 0.0
    %592 = vmatpush1.msra.mxu0 0.0
    %593 = vmatprep.subr.mxu0 0.0
    %594 = vmatpush1.msra.mxu0 0.0
    %595 = vmatprep.subr.mxu0 0.0
    %596 = vmatpush1.msra.mxu0 0.0
    %597 = vmatprep.subr.mxu0 0.0
    %598 = vmatpush1.msra.mxu0 0.0
    %599 = vmatprep.subr.mxu0 0.0
    %600 = vmatpush1.msra.mxu0 0.0
    %601 = vmatprep.subr.mxu0 0.0
    %602 = vmatpush1.msra.mxu0 0.0
    %603 = vmatprep.subr.mxu0 0.0
    %604 = vmatpush1.msra.mxu0 0.0
    %605 = vmatprep.subr.mxu0 0.0
    %606 = vmatpush1.msra.mxu0 0.0
    %607 = vmatprep.subr.mxu0 0.0
    %608 = vmatpush1.msra.mxu0 0.0
    %609 = vmatprep.subr.mxu0 0.0
    %610 = vmatpush1.msra.mxu0 0.0
    %611 = vmatprep.subr.mxu0 0.0
    %612 = vmatpush1.msra.mxu0 0.0
    %613 = vmatprep.subr.mxu0 0.0
    %614 = vmatpush1.msra.mxu0 0.0
    %615 = vmatprep.subr.mxu0 0.0
    %616 = vmatpush1.msra.mxu0 0.0
    %617 = vmatprep.subr.mxu0 0.0
    %618 = vmatpush1.msra.mxu0 0.0
    %619 = vmatprep.subr.mxu0 0.0
    %620 = vmatpush1.msra.mxu0 0.0
    %621 = vmatprep.subr.mxu0 0.0
    %622 = vmatpush1.msra.mxu0 0.0
    %623 = vmatprep.subr.mxu0 0.0
    %624 = vmatpush1.msra.mxu0 0.0
    %625 = vmatprep.subr.mxu0 0.0
    %626 = vmatpush1.msra.mxu0 0.0
    %627 = vmatprep.subr.mxu0 0.0
    %628 = vmatpush1.msra.mxu0 0.0
    %629 = vmatprep.subr.mxu0 0.0
    %630 = vmatpush1.msra.mxu0 0.0
    %631 = vmatprep.subr.mxu0 0.0
    %632 = vmatpush1.msra.mxu0 0.0
    %633 = vmatprep.mubr.f32.mxu0 0.0
    %634 = vmatmul.mubr.f32.gmra.mrb[0].mxu0 %v474
    %v635 = vpop.f32.mrb[0].mxu0
    %v636 = vadd.f32 0.0, %v635
    %v637 = vpop.f32.mrb[0].mxu0
    %v638 = vadd.f32 0.0, %v637
    %639 = vmatprep.mubr.f32.mxu0 0.0
    %640 = vmatmul.mubr.f32.gmra.mrb[0].mxu0 %v477
    %v641 = vpop.f32.mrb[0].mxu0
    %v642 = vadd.f32 0.0, %v641
    %v643 = vpop.f32.mrb[0].mxu0
    %v644 = vadd.f32 0.0, %v643
    %645 = vmatprep.mubr.f32.mxu0 0.0
    %646 = vmatmul.mubr.f32.gmra.mrb[0].mxu0 %v480
    %v647 = vpop.f32.mrb[0].mxu0
    %v648 = vadd.f32 0.0, %v647
    %v649 = vpop.f32.mrb[0].mxu0
    %v650 = vadd.f32 0.0, %v649
    %651 = vmatprep.mubr.f32.mxu0 0.0
    %652 = vmatmul.mubr.f32.gmra.mrb[0].mxu0 %v483
    %v653 = vpop.f32.mrb[0].mxu0
    %v654 = vadd.f32 0.0, %v653
    %v655 = vpop.f32.mrb[0].mxu0
    %v656 = vadd.f32 0.0, %v655
    %657 = vmatprep.mubr.f32.mxu0 0.0
    %658 = vmatmul.mubr.f32.gmra.mrb[0].mxu0 %v486
    %v659 = vpop.f32.mrb[0].mxu0
    %v660 = vadd.f32 0.0, %v659
    %v661 = vpop.f32.mrb[0].mxu0
    %v662 = vadd.f32 0.0, %v661
    %663 = vmatprep.mubr.f32.mxu0 0.0
    %664 = vmatmul.mubr.f32.gmra.mrb[0].mxu0 %v489
    %v665 = vpop.f32.mrb[0].mxu0
    %v666 = vadd.f32 0.0, %v665
    %v667 = vpop.f32.mrb[0].mxu0
    %v668 = vadd.f32 0.0, %v667
    %669 = vmatprep.mubr.f32.mxu0 0.0
    %670 = vmatmul.mubr.f32.gmra.mrb[0].mxu0 %v492
    %v671 = vpop.f32.mrb[0].mxu0
    %v672 = vadd.f32 0.0, %v671
    %v673 = vpop.f32.mrb[0].mxu0
    %v674 = vadd.f32 0.0, %v673
    %675 = vmatprep.mubr.f32.mxu0 0.0
    %676 = vmatmul.mubr.f32.gmra.mrb[0].mxu0 %v495
    %v677 = vpop.f32.mrb[0].mxu0
    %v678 = vadd.f32 0.0, %v677
    %v679 = vpop.f32.mrb[0].mxu0
    %v680 = vadd.f32 0.0, %v679
    %681 = vmatprep.mubr.f32.mxu0 0.0
    %682 = vmatmul.mubr.f32.gmra.mrb[0].mxu0 %v498
    %v683 = vpop.f32.mrb[0].mxu0
    %v684 = vadd.f32 0.0, %v683
    %v685 = vpop.f32.mrb[0].mxu0
    %v686 = vadd.f32 0.0, %v685
    %687 = vmatprep.mubr.f32.mxu0 0.0
    %688 = vmatmul.mubr.f32.gmra.mrb[0].mxu0 %v501
    %v689 = vpop.f32.mrb[0].mxu0
    %v690 = vadd.f32 0.0, %v689
    %v691 = vpop.f32.mrb[0].mxu0
    %v692 = vadd.f32 0.0, %v691
    %693 = vmatprep.mubr.f32.mxu0 0.0
    %694 = vmatmul.mubr.f32.gmra.mrb[0].mxu0 %v504
    %v695 = vpop.f32.mrb[0].mxu0
    %v696 = vadd.f32 0.0, %v695
    %v697 = vpop.f32.mrb[0].mxu0
    %v698 = vadd.f32 0.0, %v697
    %699 = vmatprep.mubr.f32.mxu0 0.0
    %700 = vmatmul.mubr.f32.gmra.mrb[0].mxu0 %v507
    %v701 = vpop.f32.mrb[0].mxu0
    %v702 = vadd.f32 0.0, %v701
    %v703 = vpop.f32.mrb[0].mxu0
    %v704 = vadd.f32 0.0, %v703
    %705 = vmatprep.mubr.f32.mxu0 0.0
    %706 = vmatmul.mubr.f32.gmra.mrb[0].mxu0 %v510
    %v707 = vpop.f32.mrb[0].mxu0
    %v708 = vadd.f32 0.0, %v707
    %v709 = vpop.f32.mrb[0].mxu0
    %v710 = vadd.f32 0.0, %v709
    %711 = vmatprep.mubr.f32.mxu0 0.0
    %712 = vmatmul.mubr.f32.gmra.mrb[0].mxu0 %v513
    %v713 = vpop.f32.mrb[0].mxu0
    %v714 = vadd.f32 0.0, %v713
    %v715 = vpop.f32.mrb[0].mxu0
    %v716 = vadd.f32 0.0, %v715
    %717 = vmatprep.mubr.f32.mxu0 0.0
    %718 = vmatmul.mubr.f32.gmra.mrb[0].mxu0 %v516
    %v719 = vpop.f32.mrb[0].mxu0
    %v720 = vadd.f32 0.0, %v719
    %v721 = vpop.f32.mrb[0].mxu0
    %v722 = vadd.f32 0.0, %v721
    %723 = vmatprep.mubr.f32.mxu0 0.0
    %724 = vmatmul.mubr.f32.gmra.mrb[0].mxu0 %v519
    %v725 = vpop.f32.mrb[0].mxu0
    %v726 = vadd.f32 0.0, %v725
    %v727 = vpop.f32.mrb[0].mxu0
    %v728 = vadd.f32 0.0, %v727
    %729 = vmatprep.mubr.f32.mxu0 0.0
    %730 = vmatmul.mubr.f32.gmra.mrb[0].mxu0 %v522
    %v731 = vpop.f32.mrb[0].mxu0
    %v732 = vadd.f32 0.0, %v731
    %v733 = vpop.f32.mrb[0].mxu0
    %v734 = vadd.f32 0.0, %v733
    %735 = vmatprep.mubr.f32.mxu0 0.0
    %736 = vmatmul.mubr.f32.gmra.mrb[0].mxu0 %v525
    %v737 = vpop.f32.mrb[0].mxu0
    %v738 = vadd.f32 0.0, %v737
    %v739 = vpop.f32.mrb[0].mxu0
    %v740 = vadd.f32 0.0, %v739
    %741 = vmatprep.mubr.f32.mxu0 0.0
    %742 = vmatmul.mubr.f32.gmra.mrb[0].mxu0 %v528
    %v743 = vpop.f32.mrb[0].mxu0
    %v744 = vadd.f32 0.0, %v743
    %v745 = vpop.f32.mrb[0].mxu0
    %v746 = vadd.f32 0.0, %v745
    %747 = vmatprep.mubr.f32.mxu0 0.0
    %748 = vmatmul.mubr.f32.gmra.mrb[0].mxu0 %v531
    %v749 = vpop.f32.mrb[0].mxu0
    %v750 = vadd.f32 0.0, %v749
    %v751 = vpop.f32.mrb[0].mxu0
    %v752 = vadd.f32 0.0, %v751
    %753 = vmatprep.mubr.f32.mxu0 0.0
    %754 = vmatmul.mubr.f32.gmra.mrb[0].mxu0 %v534
    %v755 = vpop.f32.mrb[0].mxu0
    %v756 = vadd.f32 0.0, %v755
    %v757 = vpop.f32.mrb[0].mxu0
    %v758 = vadd.f32 0.0, %v757
    %759 = vmatprep.mubr.f32.mxu0 0.0
    %760 = vmatmul.mubr.f32.gmra.mrb[0].mxu0 %v537
    %v761 = vpop.f32.mrb[0].mxu0
    %v762 = vadd.f32 0.0, %v761
    %v763 = vpop.f32.mrb[0].mxu0
    %v764 = vadd.f32 0.0, %v763
    %765 = vmatprep.mubr.f32.mxu0 0.0
    %766 = vmatmul.mubr.f32.gmra.mrb[0].mxu0 %v540
    %v767 = vpop.f32.mrb[0].mxu0
    %v768 = vadd.f32 0.0, %v767
    %v769 = vpop.f32.mrb[0].mxu0
    %v770 = vadd.f32 0.0, %v769
    %771 = vmatprep.mubr.f32.mxu0 0.0
    %772 = vmatmul.mubr.f32.gmra.mrb[0].mxu0 %v543
    %v773 = vpop.f32.mrb[0].mxu0
    %v774 = vadd.f32 0.0, %v773
    %v775 = vpop.f32.mrb[0].mxu0
    %v776 = vadd.f32 0.0, %v775
    %777 = vmatprep.mubr.f32.mxu0 0.0
    %778 = vmatmul.mubr.f32.gmra.mrb[0].mxu0 %v546
    %v779 = vpop.f32.mrb[0].mxu0
    %v780 = vadd.f32 0.0, %v779
    %v781 = vpop.f32.mrb[0].mxu0
    %v782 = vadd.f32 0.0, %v781
    %783 = vmatprep.mubr.f32.mxu0 0.0
    %784 = vmatmul.mubr.f32.gmra.mrb[0].mxu0 %v549
    %v785 = vpop.f32.mrb[0].mxu0
    %v786 = vadd.f32 0.0, %v785
    %v787 = vpop.f32.mrb[0].mxu0
    %v788 = vadd.f32 0.0, %v787
    %789 = vmatprep.mubr.f32.mxu0 0.0
    %790 = vmatmul.mubr.f32.gmra.mrb[0].mxu0 %v552
    %v791 = vpop.f32.mrb[0].mxu0
    %v792 = vadd.f32 0.0, %v791
    %v793 = vpop.f32.mrb[0].mxu0
    %v794 = vadd.f32 0.0, %v793
    %795 = vmatprep.mubr.f32.mxu0 0.0
    %796 = vmatmul.mubr.f32.gmra.mrb[0].mxu0 %v555
    %v797 = vpop.f32.mrb[0].mxu0
    %v798 = vadd.f32 0.0, %v797
    %v799 = vpop.f32.mrb[0].mxu0
    %v800 = vadd.f32 0.0, %v799
    %801 = vmatprep.mubr.f32.mxu0 0.0
    %802 = vmatmul.mubr.f32.gmra.mrb[0].mxu0 %v558
    %v803 = vpop.f32.mrb[0].mxu0
    %v804 = vadd.f32 0.0, %v803
    %v805 = vpop.f32.mrb[0].mxu0
    %v806 = vadd.f32 0.0, %v805
    %807 = vmatprep.mubr.f32.mxu0 0.0
    %808 = vmatmul.mubr.f32.gmra.mrb[0].mxu0 %v561
    %v809 = vpop.f32.mrb[0].mxu0
    %v810 = vadd.f32 0.0, %v809
    %v811 = vpop.f32.mrb[0].mxu0
    %v812 = vadd.f32 0.0, %v811
    %813 = vmatprep.mubr.f32.mxu0 0.0
    %814 = vmatmul.mubr.f32.gmra.mrb[0].mxu0 %v564
    %v815 = vpop.f32.mrb[0].mxu0
    %v816 = vadd.f32 0.0, %v815
    %v817 = vpop.f32.mrb[0].mxu0
    %v818 = vadd.f32 0.0, %v817
    %819 = vmatprep.mubr.f32.mxu0 0.0
    %820 = vmatmul.mubr.f32.gmra.mrb[0].mxu0 %v567
    %v821 = vpop.f32.mrb[0].mxu0
    %v822 = vadd.f32 0.0, %v821
    %v823 = vpop.f32.mrb[0].mxu0
    %v824 = vadd.f32 0.0, %v823
    %825 = vdwg.mxu0
    %v826 = vld [vmem:[%s5] sm:$0xff]
    %v827 = vld [vmem:[%s5 + $0x8] sm:$0xff]
    %v828 = vld [vmem:[%s5 + $0x10] sm:$0xff]
    %v829 = vld [vmem:[%s5 + $0x18] sm:$0xff]
    %v830 = vld [vmem:[%s5 + $0x20] sm:$0xff]
    %v831 = vld [vmem:[%s5 + $0x28] sm:$0xff]
    %v832 = vld [vmem:[%s5 + $0x30] sm:$0xff]
    %v833 = vld [vmem:[%s5 + $0x38] sm:$0xff]
    %835 = vset.pattern.permute.xlu0 0
    %836 = vperm.xlu0 %835, %v392
    %v837 = vpop.permute.xlu0 %836
    %840 = vset.pattern.permute.xlu0 0
    %841 = vperm.xlu0 %840, %v393
    %v842 = vpop.permute.xlu0 %841
    %845 = vset.pattern.permute.xlu0 0
    %846 = vperm.xlu0 %845, %v394
    %v847 = vpop.permute.xlu0 %846
    %850 = vset.pattern.permute.xlu0 0
    %851 = vperm.xlu0 %850, %v395
    %v852 = vpop.permute.xlu0 %851
    %855 = vset.pattern.permute.xlu0 0
    %856 = vperm.xlu0 %855, %v396
    %v857 = vpop.permute.xlu0 %856
    %860 = vset.pattern.permute.xlu0 0
    %861 = vperm.xlu0 %860, %v397
    %v862 = vpop.permute.xlu0 %861
    %865 = vset.pattern.permute.xlu0 0
    %866 = vperm.xlu0 %865, %v398
    %v867 = vpop.permute.xlu0 %866
    %870 = vset.pattern.permute.xlu0 0
    %871 = vperm.xlu0 %870, %v399
    %v872 = vpop.permute.xlu0 %871
    %875 = vset.pattern.permute.xlu0 0
    %876 = vperm.xlu0 %875, %v400
    %v877 = vpop.permute.xlu0 %876
    %880 = vset.pattern.permute.xlu0 0
    %881 = vperm.xlu0 %880, %v401
    %v882 = vpop.permute.xlu0 %881
    %885 = vset.pattern.permute.xlu0 0
    %886 = vperm.xlu0 %885, %v402
    %v887 = vpop.permute.xlu0 %886
    %890 = vset.pattern.permute.xlu0 0
    %891 = vperm.xlu0 %890, %v403
    %v892 = vpop.permute.xlu0 %891
    %895 = vset.pattern.permute.xlu0 0
    %896 = vperm.xlu0 %895, %v404
    %v897 = vpop.permute.xlu0 %896
    %900 = vset.pattern.permute.xlu0 0
    %901 = vperm.xlu0 %900, %v405
    %v902 = vpop.permute.xlu0 %901
    %905 = vset.pattern.permute.xlu0 0
    %906 = vperm.xlu0 %905, %v406
    %v907 = vpop.permute.xlu0 %906
    %910 = vset.pattern.permute.xlu0 0
    %911 = vperm.xlu0 %910, %v407
    %v912 = vpop.permute.xlu0 %911
    %915 = vset.pattern.permute.xlu0 0
    %916 = vperm.xlu0 %915, %v408
    %v917 = vpop.permute.xlu0 %916
    %920 = vset.pattern.permute.xlu0 0
    %921 = vperm.xlu0 %920, %v409
    %v922 = vpop.permute.xlu0 %921
    %925 = vset.pattern.permute.xlu0 0
    %926 = vperm.xlu0 %925, %v410
    %v927 = vpop.permute.xlu0 %926
    %930 = vset.pattern.permute.xlu0 0
    %931 = vperm.xlu0 %930, %v411
    %v932 = vpop.permute.xlu0 %931
    %935 = vset.pattern.permute.xlu0 0
    %936 = vperm.xlu0 %935, %v412
    %v937 = vpop.permute.xlu0 %936
    %940 = vset.pattern.permute.xlu0 0
    %941 = vperm.xlu0 %940, %v413
    %v942 = vpop.permute.xlu0 %941
    %945 = vset.pattern.permute.xlu0 0
    %946 = vperm.xlu0 %945, %v414
    %v947 = vpop.permute.xlu0 %946
    %950 = vset.pattern.permute.xlu0 0
    %951 = vperm.xlu0 %950, %v415
    %v952 = vpop.permute.xlu0 %951
    %955 = vset.pattern.permute.xlu0 0
    %956 = vperm.xlu0 %955, %v416
    %v957 = vpop.permute.xlu0 %956
    %960 = vset.pattern.permute.xlu0 0
    %961 = vperm.xlu0 %960, %v417
    %v962 = vpop.permute.xlu0 %961
    %965 = vset.pattern.permute.xlu0 0
    %966 = vperm.xlu0 %965, %v418
    %v967 = vpop.permute.xlu0 %966
    %970 = vset.pattern.permute.xlu0 0
    %971 = vperm.xlu0 %970, %v419
    %v972 = vpop.permute.xlu0 %971
    %975 = vset.pattern.permute.xlu0 0
    %976 = vperm.xlu0 %975, %v420
    %v977 = vpop.permute.xlu0 %976
    %980 = vset.pattern.permute.xlu0 0
    %981 = vperm.xlu0 %980, %v421
    %v982 = vpop.permute.xlu0 %981
    %985 = vset.pattern.permute.xlu0 0
    %986 = vperm.xlu0 %985, %v422
    %v987 = vpop.permute.xlu0 %986
    %990 = vset.pattern.permute.xlu0 0
    %991 = vperm.xlu0 %990, %v423
    %v992 = vpop.permute.xlu0 %991
    %v994 = vmul.f32 %v837, %v636
    %v995 = vmul.f32 %v842, %v642
    %v996 = vmul.f32 %v847, %v648
    %v997 = vmul.f32 %v852, %v654
    %v998 = vmul.f32 %v857, %v660
    %v999 = vmul.f32 %v862, %v666
    %v1000 = vmul.f32 %v867, %v672
    %v1001 = vmul.f32 %v872, %v678
    %v1002 = vmul.f32 %v877, %v684
    %v1003 = vmul.f32 %v882, %v690
    %v1004 = vmul.f32 %v887, %v696
    %v1005 = vmul.f32 %v892, %v702
    %v1006 = vmul.f32 %v897, %v708
    %v1007 = vmul.f32 %v902, %v714
    %v1008 = vmul.f32 %v907, %v720
    %v1009 = vmul.f32 %v912, %v726
    %v1010 = vmul.f32 %v917, %v732
    %v1011 = vmul.f32 %v922, %v738
    %v1012 = vmul.f32 %v927, %v744
    %v1013 = vmul.f32 %v932, %v750
    %v1014 = vmul.f32 %v937, %v756
    %v1015 = vmul.f32 %v942, %v762
    %v1016 = vmul.f32 %v947, %v768
    %v1017 = vmul.f32 %v952, %v774
    %v1018 = vmul.f32 %v957, %v780
    %v1019 = vmul.f32 %v962, %v786
    %v1020 = vmul.f32 %v967, %v792
    %v1021 = vmul.f32 %v972, %v798
    %v1022 = vmul.f32 %v977, %v804
    %v1023 = vmul.f32 %v982, %v810
    %v1024 = vmul.f32 %v987, %v816
    %v1025 = vmul.f32 %v992, %v822
    %1026 = vmatprep.subr.mxu0 0.0
    %1027 = vmatpush1.msra.mxu0 %v826
    %1028 = vmatprep.subr.mxu0 0.0
    %1029 = vmatpush1.msra.mxu0 %v827
    %1030 = vmatprep.subr.mxu0 0.0
    %1031 = vmatpush1.msra.mxu0 %v828
    %1032 = vmatprep.subr.mxu0 0.0
    %1033 = vmatpush1.msra.mxu0 %v829
    %1034 = vmatprep.subr.mxu0 0.0
    %1035 = vmatpush1.msra.mxu0 %v830
    %1036 = vmatprep.subr.mxu0 0.0
    %1037 = vmatpush1.msra.mxu0 %v831
    %1038 = vmatprep.subr.mxu0 0.0
    %1039 = vmatpush1.msra.mxu0 %v832
    %1040 = vmatprep.subr.mxu0 0.0
    %1041 = vmatpush1.msra.mxu0 %v833
    %1042 = vmatprep.subr.mxu0 0.0
    %1043 = vmatpush1.msra.mxu0 0.0
    %1044 = vmatprep.subr.mxu0 0.0
    %1045 = vmatpush1.msra.mxu0 0.0
    %1046 = vmatprep.subr.mxu0 0.0
    %1047 = vmatpush1.msra.mxu0 0.0
    %1048 = vmatprep.subr.mxu0 0.0
    %1049 = vmatpush1.msra.mxu0 0.0
    %1050 = vmatprep.subr.mxu0 0.0
    %1051 = vmatpush1.msra.mxu0 0.0
    %1052 = vmatprep.subr.mxu0 0.0
    %1053 = vmatpush1.msra.mxu0 0.0
    %1054 = vmatprep.subr.mxu0 0.0
    %1055 = vmatpush1.msra.mxu0 0.0
    %1056 = vmatprep.subr.mxu0 0.0
    %1057 = vmatpush1.msra.mxu0 0.0
    %1058 = vmatprep.subr.mxu0 0.0
    %1059 = vmatpush1.msra.mxu0 0.0
    %1060 = vmatprep.subr.mxu0 0.0
    %1061 = vmatpush1.msra.mxu0 0.0
    %1062 = vmatprep.subr.mxu0 0.0
    %1063 = vmatpush1.msra.mxu0 0.0
    %1064 = vmatprep.subr.mxu0 0.0
    %1065 = vmatpush1.msra.mxu0 0.0
    %1066 = vmatprep.subr.mxu0 0.0
    %1067 = vmatpush1.msra.mxu0 0.0
    %1068 = vmatprep.subr.mxu0 0.0
    %1069 = vmatpush1.msra.mxu0 0.0
    %1070 = vmatprep.subr.mxu0 0.0
    %1071 = vmatpush1.msra.mxu0 0.0
    %1072 = vmatprep.subr.mxu0 0.0
    %1073 = vmatpush1.msra.mxu0 0.0
    %1074 = vmatprep.subr.mxu0 0.0
    %1075 = vmatpush1.msra.mxu0 0.0
    %1076 = vmatprep.subr.mxu0 0.0
    %1077 = vmatpush1.msra.mxu0 0.0
    %1078 = vmatprep.subr.mxu0 0.0
    %1079 = vmatpush1.msra.mxu0 0.0
    %1080 = vmatprep.subr.mxu0 0.0
    %1081 = vmatpush1.msra.mxu0 0.0
    %1082 = vmatprep.subr.mxu0 0.0
    %1083 = vmatpush1.msra.mxu0 0.0
    %1084 = vmatprep.subr.mxu0 0.0
    %1085 = vmatpush1.msra.mxu0 0.0
    %1086 = vmatprep.subr.mxu0 0.0
    %1087 = vmatpush1.msra.mxu0 0.0
    %1088 = vmatprep.subr.mxu0 0.0
    %1089 = vmatpush1.msra.mxu0 0.0
    %1090 = vmatprep.mubr.f32.mxu0 0.0
    %1091 = vmatmul.mubr.f32.gmra.mrb[0].mxu0 %v474
    %v1092 = vpop.f32.mrb[0].mxu0
    %v1093 = vadd.f32 %v994, %v1092
    %v1094 = vpop.f32.mrb[0].mxu0
    %1095 = vmatprep.mubr.f32.mxu0 0.0
    %1096 = vmatmul.mubr.f32.gmra.mrb[0].mxu0 %v477
    %v1097 = vpop.f32.mrb[0].mxu0
    %v1098 = vadd.f32 %v995, %v1097
    %v1099 = vpop.f32.mrb[0].mxu0
    %1100 = vmatprep.mubr.f32.mxu0 0.0
    %1101 = vmatmul.mubr.f32.gmra.mrb[0].mxu0 %v480
    %v1102 = vpop.f32.mrb[0].mxu0
    %v1103 = vadd.f32 %v996, %v1102
    %v1104 = vpop.f32.mrb[0].mxu0
    %1105 = vmatprep.mubr.f32.mxu0 0.0
    %1106 = vmatmul.mubr.f32.gmra.mrb[0].mxu0 %v483
    %v1107 = vpop.f32.mrb[0].mxu0
    %v1108 = vadd.f32 %v997, %v1107
    %v1109 = vpop.f32.mrb[0].mxu0
    %1110 = vmatprep.mubr.f32.mxu0 0.0
    %1111 = vmatmul.mubr.f32.gmra.mrb[0].mxu0 %v486
    %v1112 = vpop.f32.mrb[0].mxu0
    %v1113 = vadd.f32 %v998, %v1112
    %v1114 = vpop.f32.mrb[0].mxu0
    %1115 = vmatprep.mubr.f32.mxu0 0.0
    %1116 = vmatmul.mubr.f32.gmra.mrb[0].mxu0 %v489
    %v1117 = vpop.f32.mrb[0].mxu0
    %v1118 = vadd.f32 %v999, %v1117
    %v1119 = vpop.f32.mrb[0].mxu0
    %1120 = vmatprep.mubr.f32.mxu0 0.0
    %1121 = vmatmul.mubr.f32.gmra.mrb[0].mxu0 %v492
    %v1122 = vpop.f32.mrb[0].mxu0
    %v1123 = vadd.f32 %v1000, %v1122
    %v1124 = vpop.f32.mrb[0].mxu0
    %1125 = vmatprep.mubr.f32.mxu0 0.0
    %1126 = vmatmul.mubr.f32.gmra.mrb[0].mxu0 %v495
    %v1127 = vpop.f32.mrb[0].mxu0
    %v1128 = vadd.f32 %v1001, %v1127
    %v1129 = vpop.f32.mrb[0].mxu0
    %1130 = vmatprep.mubr.f32.mxu0 0.0
    %1131 = vmatmul.mubr.f32.gmra.mrb[0].mxu0 %v498
    %v1132 = vpop.f32.mrb[0].mxu0
    %v1133 = vadd.f32 %v1002, %v1132
    %v1134 = vpop.f32.mrb[0].mxu0
    %1135 = vmatprep.mubr.f32.mxu0 0.0
    %1136 = vmatmul.mubr.f32.gmra.mrb[0].mxu0 %v501
    %v1137 = vpop.f32.mrb[0].mxu0
    %v1138 = vadd.f32 %v1003, %v1137
    %v1139 = vpop.f32.mrb[0].mxu0
    %1140 = vmatprep.mubr.f32.mxu0 0.0
    %1141 = vmatmul.mubr.f32.gmra.mrb[0].mxu0 %v504
    %v1142 = vpop.f32.mrb[0].mxu0
    %v1143 = vadd.f32 %v1004, %v1142
    %v1144 = vpop.f32.mrb[0].mxu0
    %1145 = vmatprep.mubr.f32.mxu0 0.0
    %1146 = vmatmul.mubr.f32.gmra.mrb[0].mxu0 %v507
    %v1147 = vpop.f32.mrb[0].mxu0
    %v1148 = vadd.f32 %v1005, %v1147
    %v1149 = vpop.f32.mrb[0].mxu0
    %1150 = vmatprep.mubr.f32.mxu0 0.0
    %1151 = vmatmul.mubr.f32.gmra.mrb[0].mxu0 %v510
    %v1152 = vpop.f32.mrb[0].mxu0
    %v1153 = vadd.f32 %v1006, %v1152
    %v1154 = vpop.f32.mrb[0].mxu0
    %1155 = vmatprep.mubr.f32.mxu0 0.0
    %1156 = vmatmul.mubr.f32.gmra.mrb[0].mxu0 %v513
    %v1157 = vpop.f32.mrb[0].mxu0
    %v1158 = vadd.f32 %v1007, %v1157
    %v1159 = vpop.f32.mrb[0].mxu0
    %1160 = vmatprep.mubr.f32.mxu0 0.0
    %1161 = vmatmul.mubr.f32.gmra.mrb[0].mxu0 %v516
    %v1162 = vpop.f32.mrb[0].mxu0
    %v1163 = vadd.f32 %v1008, %v1162
    %v1164 = vpop.f32.mrb[0].mxu0
    %1165 = vmatprep.mubr.f32.mxu0 0.0
    %1166 = vmatmul.mubr.f32.gmra.mrb[0].mxu0 %v519
    %v1167 = vpop.f32.mrb[0].mxu0
    %v1168 = vadd.f32 %v1009, %v1167
    %v1169 = vpop.f32.mrb[0].mxu0
    %1170 = vmatprep.mubr.f32.mxu0 0.0
    %1171 = vmatmul.mubr.f32.gmra.mrb[0].mxu0 %v522
    %v1172 = vpop.f32.mrb[0].mxu0
    %v1173 = vadd.f32 %v1010, %v1172
    %v1174 = vpop.f32.mrb[0].mxu0
    %1175 = vmatprep.mubr.f32.mxu0 0.0
    %1176 = vmatmul.mubr.f32.gmra.mrb[0].mxu0 %v525
    %v1177 = vpop.f32.mrb[0].mxu0
    %v1178 = vadd.f32 %v1011, %v1177
    %v1179 = vpop.f32.mrb[0].mxu0
    %1180 = vmatprep.mubr.f32.mxu0 0.0
    %1181 = vmatmul.mubr.f32.gmra.mrb[0].mxu0 %v528
    %v1182 = vpop.f32.mrb[0].mxu0
    %v1183 = vadd.f32 %v1012, %v1182
    %v1184 = vpop.f32.mrb[0].mxu0
    %1185 = vmatprep.mubr.f32.mxu0 0.0
    %1186 = vmatmul.mubr.f32.gmra.mrb[0].mxu0 %v531
    %v1187 = vpop.f32.mrb[0].mxu0
    %v1188 = vadd.f32 %v1013, %v1187
    %v1189 = vpop.f32.mrb[0].mxu0
    %1190 = vmatprep.mubr.f32.mxu0 0.0
    %1191 = vmatmul.mubr.f32.gmra.mrb[0].mxu0 %v534
    %v1192 = vpop.f32.mrb[0].mxu0
    %v1193 = vadd.f32 %v1014, %v1192
    %v1194 = vpop.f32.mrb[0].mxu0
    %1195 = vmatprep.mubr.f32.mxu0 0.0
    %1196 = vmatmul.mubr.f32.gmra.mrb[0].mxu0 %v537
    %v1197 = vpop.f32.mrb[0].mxu0
    %v1198 = vadd.f32 %v1015, %v1197
    %v1199 = vpop.f32.mrb[0].mxu0
    %1200 = vmatprep.mubr.f32.mxu0 0.0
    %1201 = vmatmul.mubr.f32.gmra.mrb[0].mxu0 %v540
    %v1202 = vpop.f32.mrb[0].mxu0
    %v1203 = vadd.f32 %v1016, %v1202
    %v1204 = vpop.f32.mrb[0].mxu0
    %1205 = vmatprep.mubr.f32.mxu0 0.0
    %1206 = vmatmul.mubr.f32.gmra.mrb[0].mxu0 %v543
    %v1207 = vpop.f32.mrb[0].mxu0
    %v1208 = vadd.f32 %v1017, %v1207
    %v1209 = vpop.f32.mrb[0].mxu0
    %1210 = vmatprep.mubr.f32.mxu0 0.0
    %1211 = vmatmul.mubr.f32.gmra.mrb[0].mxu0 %v546
    %v1212 = vpop.f32.mrb[0].mxu0
    %v1213 = vadd.f32 %v1018, %v1212
    %v1214 = vpop.f32.mrb[0].mxu0
    %1215 = vmatprep.mubr.f32.mxu0 0.0
    %1216 = vmatmul.mubr.f32.gmra.mrb[0].mxu0 %v549
    %v1217 = vpop.f32.mrb[0].mxu0
    %v1218 = vadd.f32 %v1019, %v1217
    %v1219 = vpop.f32.mrb[0].mxu0
    %1220 = vmatprep.mubr.f32.mxu0 0.0
    %1221 = vmatmul.mubr.f32.gmra.mrb[0].mxu0 %v552
    %v1222 = vpop.f32.mrb[0].mxu0
    %v1223 = vadd.f32 %v1020, %v1222
    %v1224 = vpop.f32.mrb[0].mxu0
    %1225 = vmatprep.mubr.f32.mxu0 0.0
    %1226 = vmatmul.mubr.f32.gmra.mrb[0].mxu0 %v555
    %v1227 = vpop.f32.mrb[0].mxu0
    %v1228 = vadd.f32 %v1021, %v1227
    %v1229 = vpop.f32.mrb[0].mxu0
    %1230 = vmatprep.mubr.f32.mxu0 0.0
    %1231 = vmatmul.mubr.f32.gmra.mrb[0].mxu0 %v558
    %v1232 = vpop.f32.mrb[0].mxu0
    %v1233 = vadd.f32 %v1022, %v1232
    %v1234 = vpop.f32.mrb[0].mxu0
    %1235 = vmatprep.mubr.f32.mxu0 0.0
    %1236 = vmatmul.mubr.f32.gmra.mrb[0].mxu0 %v561
    %v1237 = vpop.f32.mrb[0].mxu0
    %v1238 = vadd.f32 %v1023, %v1237
    %v1239 = vpop.f32.mrb[0].mxu0
    %1240 = vmatprep.mubr.f32.mxu0 0.0
    %1241 = vmatmul.mubr.f32.gmra.mrb[0].mxu0 %v564
    %v1242 = vpop.f32.mrb[0].mxu0
    %v1243 = vadd.f32 %v1024, %v1242
    %v1244 = vpop.f32.mrb[0].mxu0
    %1245 = vmatprep.mubr.f32.mxu0 0.0
    %1246 = vmatmul.mubr.f32.gmra.mrb[0].mxu0 %v567
    %v1247 = vpop.f32.mrb[0].mxu0
    %v1248 = vadd.f32 %v1025, %v1247
    %v1249 = vpop.f32.mrb[0].mxu0
    %1250 = vdwg.mxu0
    %1251 = vset.pattern.permute.xlu0 1
    %1252 = vperm.xlu0 %1251, %v392
    %v1253 = vpop.permute.xlu0 %1252
    %1255 = vset.pattern.permute.xlu0 1
    %1256 = vperm.xlu0 %1255, %v393
    %v1257 = vpop.permute.xlu0 %1256
    %1259 = vset.pattern.permute.xlu0 1
    %1260 = vperm.xlu0 %1259, %v394
    %v1261 = vpop.permute.xlu0 %1260
    %1263 = vset.pattern.permute.xlu0 1
    %1264 = vperm.xlu0 %1263, %v395
    %v1265 = vpop.permute.xlu0 %1264
    %1267 = vset.pattern.permute.xlu0 1
    %1268 = vperm.xlu0 %1267, %v396
    %v1269 = vpop.permute.xlu0 %1268
    %1271 = vset.pattern.permute.xlu0 1
    %1272 = vperm.xlu0 %1271, %v397
    %v1273 = vpop.permute.xlu0 %1272
    %1275 = vset.pattern.permute.xlu0 1
    %1276 = vperm.xlu0 %1275, %v398
    %v1277 = vpop.permute.xlu0 %1276
    %1279 = vset.pattern.permute.xlu0 1
    %1280 = vperm.xlu0 %1279, %v399
    %v1281 = vpop.permute.xlu0 %1280
    %1283 = vset.pattern.permute.xlu0 1
    %1284 = vperm.xlu0 %1283, %v400
    %v1285 = vpop.permute.xlu0 %1284
    %1287 = vset.pattern.permute.xlu0 1
    %1288 = vperm.xlu0 %1287, %v401
    %v1289 = vpop.permute.xlu0 %1288
    %1291 = vset.pattern.permute.xlu0 1
    %1292 = vperm.xlu0 %1291, %v402
    %v1293 = vpop.permute.xlu0 %1292
    %1295 = vset.pattern.permute.xlu0 1
    %1296 = vperm.xlu0 %1295, %v403
    %v1297 = vpop.permute.xlu0 %1296
    %1299 = vset.pattern.permute.xlu0 1
    %1300 = vperm.xlu0 %1299, %v404
    %v1301 = vpop.permute.xlu0 %1300
    %1303 = vset.pattern.permute.xlu0 1
    %1304 = vperm.xlu0 %1303, %v405
    %v1305 = vpop.permute.xlu0 %1304
    %1307 = vset.pattern.permute.xlu0 1
    %1308 = vperm.xlu0 %1307, %v406
    %v1309 = vpop.permute.xlu0 %1308
    %1311 = vset.pattern.permute.xlu0 1
    %1312 = vperm.xlu0 %1311, %v407
    %v1313 = vpop.permute.xlu0 %1312
    %1315 = vset.pattern.permute.xlu0 1
    %1316 = vperm.xlu0 %1315, %v408
    %v1317 = vpop.permute.xlu0 %1316
    %1319 = vset.pattern.permute.xlu0 1
    %1320 = vperm.xlu0 %1319, %v409
    %v1321 = vpop.permute.xlu0 %1320
    %1323 = vset.pattern.permute.xlu0 1
    %1324 = vperm.xlu0 %1323, %v410
    %v1325 = vpop.permute.xlu0 %1324
    %1327 = vset.pattern.permute.xlu0 1
    %1328 = vperm.xlu0 %1327, %v411
    %v1329 = vpop.permute.xlu0 %1328
    %1331 = vset.pattern.permute.xlu0 1
    %1332 = vperm.xlu0 %1331, %v412
    %v1333 = vpop.permute.xlu0 %1332
    %1335 = vset.pattern.permute.xlu0 1
    %1336 = vperm.xlu0 %1335, %v413
    %v1337 = vpop.permute.xlu0 %1336
    %1339 = vset.pattern.permute.xlu0 1
    %1340 = vperm.xlu0 %1339, %v414
    %v1341 = vpop.permute.xlu0 %1340
    %1343 = vset.pattern.permute.xlu0 1
    %1344 = vperm.xlu0 %1343, %v415
    %v1345 = vpop.permute.xlu0 %1344
    %1347 = vset.pattern.permute.xlu0 1
    %1348 = vperm.xlu0 %1347, %v416
    %v1349 = vpop.permute.xlu0 %1348
    %1351 = vset.pattern.permute.xlu0 1
    %1352 = vperm.xlu0 %1351, %v417
    %v1353 = vpop.permute.xlu0 %1352
    %1355 = vset.pattern.permute.xlu0 1
    %1356 = vperm.xlu0 %1355, %v418
    %v1357 = vpop.permute.xlu0 %1356
    %1359 = vset.pattern.permute.xlu0 1
    %1360 = vperm.xlu0 %1359, %v419
    %v1361 = vpop.permute.xlu0 %1360
    %1363 = vset.pattern.permute.xlu0 1
    %1364 = vperm.xlu0 %1363, %v420
    %v1365 = vpop.permute.xlu0 %1364
    %1367 = vset.pattern.permute.xlu0 1
    %1368 = vperm.xlu0 %1367, %v421
    %v1369 = vpop.permute.xlu0 %1368
    %1371 = vset.pattern.permute.xlu0 1
    %1372 = vperm.xlu0 %1371, %v422
    %v1373 = vpop.permute.xlu0 %1372
    %1375 = vset.pattern.permute.xlu0 1
    %1376 = vperm.xlu0 %1375, %v423
    %v1377 = vpop.permute.xlu0 %1376
    %v1379 = vmul.f32 %v1253, %v636
    %v1380 = vmul.f32 %v1257, %v642
    %v1381 = vmul.f32 %v1261, %v648
    %v1382 = vmul.f32 %v1265, %v654
    %v1383 = vmul.f32 %v1269, %v660
    %v1384 = vmul.f32 %v1273, %v666
    %v1385 = vmul.f32 %v1277, %v672
    %v1386 = vmul.f32 %v1281, %v678
    %v1387 = vmul.f32 %v1285, %v684
    %v1388 = vmul.f32 %v1289, %v690
    %v1389 = vmul.f32 %v1293, %v696
    %v1390 = vmul.f32 %v1297, %v702
    %v1391 = vmul.f32 %v1301, %v708
    %v1392 = vmul.f32 %v1305, %v714
    %v1393 = vmul.f32 %v1309, %v720
    %v1394 = vmul.f32 %v1313, %v726
    %v1395 = vmul.f32 %v1317, %v732
    %v1396 = vmul.f32 %v1321, %v738
    %v1397 = vmul.f32 %v1325, %v744
    %v1398 = vmul.f32 %v1329, %v750
    %v1399 = vmul.f32 %v1333, %v756
    %v1400 = vmul.f32 %v1337, %v762
    %v1401 = vmul.f32 %v1341, %v768
    %v1402 = vmul.f32 %v1345, %v774
    %v1403 = vmul.f32 %v1349, %v780
    %v1404 = vmul.f32 %v1353, %v786
    %v1405 = vmul.f32 %v1357, %v792
    %v1406 = vmul.f32 %v1361, %v798
    %v1407 = vmul.f32 %v1365, %v804
    %v1408 = vmul.f32 %v1369, %v810
    %v1409 = vmul.f32 %v1373, %v816
    %v1410 = vmul.f32 %v1377, %v822
    %1443 = vrot.lane.b32.xlu0 %v1379, 96
    %v1444 = vpop.permute.xlu0 %1443
    %1445 = vrot.lane.b32.xlu0 %v1380, 96
    %v1446 = vpop.permute.xlu0 %1445
    %1447 = vrot.lane.b32.xlu0 %v1381, 96
    %v1448 = vpop.permute.xlu0 %1447
    %1449 = vrot.lane.b32.xlu0 %v1382, 96
    %v1450 = vpop.permute.xlu0 %1449
    %1451 = vrot.lane.b32.xlu0 %v1383, 96
    %v1452 = vpop.permute.xlu0 %1451
    %1453 = vrot.lane.b32.xlu0 %v1384, 96
    %v1454 = vpop.permute.xlu0 %1453
    %1455 = vrot.lane.b32.xlu0 %v1385, 96
    %v1456 = vpop.permute.xlu0 %1455
    %1457 = vrot.lane.b32.xlu0 %v1386, 96
    %v1458 = vpop.permute.xlu0 %1457
    %1459 = vrot.lane.b32.xlu0 %v1387, 96
    %v1460 = vpop.permute.xlu0 %1459
    %1461 = vrot.lane.b32.xlu0 %v1388, 96
    %v1462 = vpop.permute.xlu0 %1461
    %1463 = vrot.lane.b32.xlu0 %v1389, 96
    %v1464 = vpop.permute.xlu0 %1463
    %1465 = vrot.lane.b32.xlu0 %v1390, 96
    %v1466 = vpop.permute.xlu0 %1465
    %1467 = vrot.lane.b32.xlu0 %v1391, 96
    %v1468 = vpop.permute.xlu0 %1467
    %1469 = vrot.lane.b32.xlu0 %v1392, 96
    %v1470 = vpop.permute.xlu0 %1469
    %1471 = vrot.lane.b32.xlu0 %v1393, 96
    %v1472 = vpop.permute.xlu0 %1471
    %1473 = vrot.lane.b32.xlu0 %v1394, 96
    %v1474 = vpop.permute.xlu0 %1473
    %1475 = vrot.lane.b32.xlu0 %v1395, 96
    %v1476 = vpop.permute.xlu0 %1475
    %1477 = vrot.lane.b32.xlu0 %v1396, 96
    %v1478 = vpop.permute.xlu0 %1477
    %1479 = vrot.lane.b32.xlu0 %v1397, 96
    %v1480 = vpop.permute.xlu0 %1479
    %1481 = vrot.lane.b32.xlu0 %v1398, 96
    %v1482 = vpop.permute.xlu0 %1481
    %1483 = vrot.lane.b32.xlu0 %v1399, 96
    %v1484 = vpop.permute.xlu0 %1483
    %1485 = vrot.lane.b32.xlu0 %v1400, 96
    %v1486 = vpop.permute.xlu0 %1485
    %1487 = vrot.lane.b32.xlu0 %v1401, 96
    %v1488 = vpop.permute.xlu0 %1487
    %1489 = vrot.lane.b32.xlu0 %v1402, 96
    %v1490 = vpop.permute.xlu0 %1489
    %1491 = vrot.lane.b32.xlu0 %v1403, 96
    %v1492 = vpop.permute.xlu0 %1491
    %1493 = vrot.lane.b32.xlu0 %v1404, 96
    %v1494 = vpop.permute.xlu0 %1493
    %1495 = vrot.lane.b32.xlu0 %v1405, 96
    %v1496 = vpop.permute.xlu0 %1495
    %1497 = vrot.lane.b32.xlu0 %v1406, 96
    %v1498 = vpop.permute.xlu0 %1497
    %1499 = vrot.lane.b32.xlu0 %v1407, 96
    %v1500 = vpop.permute.xlu0 %1499
    %1501 = vrot.lane.b32.xlu0 %v1408, 96
    %v1502 = vpop.permute.xlu0 %1501
    %1503 = vrot.lane.b32.xlu0 %v1409, 96
    %v1504 = vpop.permute.xlu0 %1503
    %1505 = vrot.lane.b32.xlu0 %v1410, 96
    %v1506 = vpop.permute.xlu0 %1505
    %v1539 = vadd.f32 %v1093, %v1444
    %v1540 = vadd.f32 %v1098, %v1446
    %v1541 = vadd.f32 %v1103, %v1448
    %v1542 = vadd.f32 %v1108, %v1450
    %v1543 = vadd.f32 %v1113, %v1452
    %v1544 = vadd.f32 %v1118, %v1454
    %v1545 = vadd.f32 %v1123, %v1456
    %v1546 = vadd.f32 %v1128, %v1458
    %v1547 = vadd.f32 %v1133, %v1460
    %v1548 = vadd.f32 %v1138, %v1462
    %v1549 = vadd.f32 %v1143, %v1464
    %v1550 = vadd.f32 %v1148, %v1466
    %v1551 = vadd.f32 %v1153, %v1468
    %v1552 = vadd.f32 %v1158, %v1470
    %v1553 = vadd.f32 %v1163, %v1472
    %v1554 = vadd.f32 %v1168, %v1474
    %v1555 = vadd.f32 %v1173, %v1476
    %v1556 = vadd.f32 %v1178, %v1478
    %v1557 = vadd.f32 %v1183, %v1480
    %v1558 = vadd.f32 %v1188, %v1482
    %v1559 = vadd.f32 %v1193, %v1484
    %v1560 = vadd.f32 %v1198, %v1486
    %v1561 = vadd.f32 %v1203, %v1488
    %v1562 = vadd.f32 %v1208, %v1490
    %v1563 = vadd.f32 %v1213, %v1492
    %v1564 = vadd.f32 %v1218, %v1494
    %v1565 = vadd.f32 %v1223, %v1496
    %v1566 = vadd.f32 %v1228, %v1498
    %v1567 = vadd.f32 %v1233, %v1500
    %v1568 = vadd.f32 %v1238, %v1502
    %v1569 = vadd.f32 %v1243, %v1504
    %v1570 = vadd.f32 %v1248, %v1506
    %1571 = vset.pattern.permute.xlu0 2
    %1572 = vperm.xlu0 %1571, %v392
    %v1573 = vpop.permute.xlu0 %1572
    %1575 = vset.pattern.permute.xlu0 2
    %1576 = vperm.xlu0 %1575, %v393
    %v1577 = vpop.permute.xlu0 %1576
    %1579 = vset.pattern.permute.xlu0 2
    %1580 = vperm.xlu0 %1579, %v394
    %v1581 = vpop.permute.xlu0 %1580
    %1583 = vset.pattern.permute.xlu0 2
    %1584 = vperm.xlu0 %1583, %v395
    %v1585 = vpop.permute.xlu0 %1584
    %1587 = vset.pattern.permute.xlu0 2
    %1588 = vperm.xlu0 %1587, %v396
    %v1589 = vpop.permute.xlu0 %1588
    %1591 = vset.pattern.permute.xlu0 2
    %1592 = vperm.xlu0 %1591, %v397
    %v1593 = vpop.permute.xlu0 %1592
    %1595 = vset.pattern.permute.xlu0 2
    %1596 = vperm.xlu0 %1595, %v398
    %v1597 = vpop.permute.xlu0 %1596
    %1599 = vset.pattern.permute.xlu0 2
    %1600 = vperm.xlu0 %1599, %v399
    %v1601 = vpop.permute.xlu0 %1600
    %1603 = vset.pattern.permute.xlu0 2
    %1604 = vperm.xlu0 %1603, %v400
    %v1605 = vpop.permute.xlu0 %1604
    %1607 = vset.pattern.permute.xlu0 2
    %1608 = vperm.xlu0 %1607, %v401
    %v1609 = vpop.permute.xlu0 %1608
    %1611 = vset.pattern.permute.xlu0 2
    %1612 = vperm.xlu0 %1611, %v402
    %v1613 = vpop.permute.xlu0 %1612
    %1615 = vset.pattern.permute.xlu0 2
    %1616 = vperm.xlu0 %1615, %v403
    %v1617 = vpop.permute.xlu0 %1616
    %1619 = vset.pattern.permute.xlu0 2
    %1620 = vperm.xlu0 %1619, %v404
    %v1621 = vpop.permute.xlu0 %1620
    %1623 = vset.pattern.permute.xlu0 2
    %1624 = vperm.xlu0 %1623, %v405
    %v1625 = vpop.permute.xlu0 %1624
    %1627 = vset.pattern.permute.xlu0 2
    %1628 = vperm.xlu0 %1627, %v406
    %v1629 = vpop.permute.xlu0 %1628
    %1631 = vset.pattern.permute.xlu0 2
    %1632 = vperm.xlu0 %1631, %v407
    %v1633 = vpop.permute.xlu0 %1632
    %1635 = vset.pattern.permute.xlu0 2
    %1636 = vperm.xlu0 %1635, %v408
    %v1637 = vpop.permute.xlu0 %1636
    %1639 = vset.pattern.permute.xlu0 2
    %1640 = vperm.xlu0 %1639, %v409
    %v1641 = vpop.permute.xlu0 %1640
    %1643 = vset.pattern.permute.xlu0 2
    %1644 = vperm.xlu0 %1643, %v410
    %v1645 = vpop.permute.xlu0 %1644
    %1647 = vset.pattern.permute.xlu0 2
    %1648 = vperm.xlu0 %1647, %v411
    %v1649 = vpop.permute.xlu0 %1648
    %1651 = vset.pattern.permute.xlu0 2
    %1652 = vperm.xlu0 %1651, %v412
    %v1653 = vpop.permute.xlu0 %1652
    %1655 = vset.pattern.permute.xlu0 2
    %1656 = vperm.xlu0 %1655, %v413
    %v1657 = vpop.permute.xlu0 %1656
    %1659 = vset.pattern.permute.xlu0 2
    %1660 = vperm.xlu0 %1659, %v414
    %v1661 = vpop.permute.xlu0 %1660
    %1663 = vset.pattern.permute.xlu0 2
    %1664 = vperm.xlu0 %1663, %v415
    %v1665 = vpop.permute.xlu0 %1664
    %1667 = vset.pattern.permute.xlu0 2
    %1668 = vperm.xlu0 %1667, %v416
    %v1669 = vpop.permute.xlu0 %1668
    %1671 = vset.pattern.permute.xlu0 2
    %1672 = vperm.xlu0 %1671, %v417
    %v1673 = vpop.permute.xlu0 %1672
    %1675 = vset.pattern.permute.xlu0 2
    %1676 = vperm.xlu0 %1675, %v418
    %v1677 = vpop.permute.xlu0 %1676
    %1679 = vset.pattern.permute.xlu0 2
    %1680 = vperm.xlu0 %1679, %v419
    %v1681 = vpop.permute.xlu0 %1680
    %1683 = vset.pattern.permute.xlu0 2
    %1684 = vperm.xlu0 %1683, %v420
    %v1685 = vpop.permute.xlu0 %1684
    %1687 = vset.pattern.permute.xlu0 2
    %1688 = vperm.xlu0 %1687, %v421
    %v1689 = vpop.permute.xlu0 %1688
    %1691 = vset.pattern.permute.xlu0 2
    %1692 = vperm.xlu0 %1691, %v422
    %v1693 = vpop.permute.xlu0 %1692
    %1695 = vset.pattern.permute.xlu0 2
    %1696 = vperm.xlu0 %1695, %v423
    %v1697 = vpop.permute.xlu0 %1696
    %v1699 = vmul.f32 %v1573, %v636
    %v1700 = vmul.f32 %v1577, %v642
    %v1701 = vmul.f32 %v1581, %v648
    %v1702 = vmul.f32 %v1585, %v654
    %v1703 = vmul.f32 %v1589, %v660
    %v1704 = vmul.f32 %v1593, %v666
    %v1705 = vmul.f32 %v1597, %v672
    %v1706 = vmul.f32 %v1601, %v678
    %v1707 = vmul.f32 %v1605, %v684
    %v1708 = vmul.f32 %v1609, %v690
    %v1709 = vmul.f32 %v1613, %v696
    %v1710 = vmul.f32 %v1617, %v702
    %v1711 = vmul.f32 %v1621, %v708
    %v1712 = vmul.f32 %v1625, %v714
    %v1713 = vmul.f32 %v1629, %v720
    %v1714 = vmul.f32 %v1633, %v726
    %v1715 = vmul.f32 %v1637, %v732
    %v1716 = vmul.f32 %v1641, %v738
    %v1717 = vmul.f32 %v1645, %v744
    %v1718 = vmul.f32 %v1649, %v750
    %v1719 = vmul.f32 %v1653, %v756
    %v1720 = vmul.f32 %v1657, %v762
    %v1721 = vmul.f32 %v1661, %v768
    %v1722 = vmul.f32 %v1665, %v774
    %v1723 = vmul.f32 %v1669, %v780
    %v1724 = vmul.f32 %v1673, %v786
    %v1725 = vmul.f32 %v1677, %v792
    %v1726 = vmul.f32 %v1681, %v798
    %v1727 = vmul.f32 %v1685, %v804
    %v1728 = vmul.f32 %v1689, %v810
    %v1729 = vmul.f32 %v1693, %v816
    %v1730 = vmul.f32 %v1697, %v822
    %1763 = vrot.lane.b32.xlu0 %v1699, 64
    %v1764 = vpop.permute.xlu0 %1763
    %1765 = vrot.lane.b32.xlu0 %v1700, 64
    %v1766 = vpop.permute.xlu0 %1765
    %1767 = vrot.lane.b32.xlu0 %v1701, 64
    %v1768 = vpop.permute.xlu0 %1767
    %1769 = vrot.lane.b32.xlu0 %v1702, 64
    %v1770 = vpop.permute.xlu0 %1769
    %1771 = vrot.lane.b32.xlu0 %v1703, 64
    %v1772 = vpop.permute.xlu0 %1771
    %1773 = vrot.lane.b32.xlu0 %v1704, 64
    %v1774 = vpop.permute.xlu0 %1773
    %1775 = vrot.lane.b32.xlu0 %v1705, 64
    %v1776 = vpop.permute.xlu0 %1775
    %1777 = vrot.lane.b32.xlu0 %v1706, 64
    %v1778 = vpop.permute.xlu0 %1777
    %1779 = vrot.lane.b32.xlu0 %v1707, 64
    %v1780 = vpop.permute.xlu0 %1779
    %1781 = vrot.lane.b32.xlu0 %v1708, 64
    %v1782 = vpop.permute.xlu0 %1781
    %1783 = vrot.lane.b32.xlu0 %v1709, 64
    %v1784 = vpop.permute.xlu0 %1783
    %1785 = vrot.lane.b32.xlu0 %v1710, 64
    %v1786 = vpop.permute.xlu0 %1785
    %1787 = vrot.lane.b32.xlu0 %v1711, 64
    %v1788 = vpop.permute.xlu0 %1787
    %1789 = vrot.lane.b32.xlu0 %v1712, 64
    %v1790 = vpop.permute.xlu0 %1789
    %1791 = vrot.lane.b32.xlu0 %v1713, 64
    %v1792 = vpop.permute.xlu0 %1791
    %1793 = vrot.lane.b32.xlu0 %v1714, 64
    %v1794 = vpop.permute.xlu0 %1793
    %1795 = vrot.lane.b32.xlu0 %v1715, 64
    %v1796 = vpop.permute.xlu0 %1795
    %1797 = vrot.lane.b32.xlu0 %v1716, 64
    %v1798 = vpop.permute.xlu0 %1797
    %1799 = vrot.lane.b32.xlu0 %v1717, 64
    %v1800 = vpop.permute.xlu0 %1799
    %1801 = vrot.lane.b32.xlu0 %v1718, 64
    %v1802 = vpop.permute.xlu0 %1801
    %1803 = vrot.lane.b32.xlu0 %v1719, 64
    %v1804 = vpop.permute.xlu0 %1803
    %1805 = vrot.lane.b32.xlu0 %v1720, 64
    %v1806 = vpop.permute.xlu0 %1805
    %1807 = vrot.lane.b32.xlu0 %v1721, 64
    %v1808 = vpop.permute.xlu0 %1807
    %1809 = vrot.lane.b32.xlu0 %v1722, 64
    %v1810 = vpop.permute.xlu0 %1809
    %1811 = vrot.lane.b32.xlu0 %v1723, 64
    %v1812 = vpop.permute.xlu0 %1811
    %1813 = vrot.lane.b32.xlu0 %v1724, 64
    %v1814 = vpop.permute.xlu0 %1813
    %1815 = vrot.lane.b32.xlu0 %v1725, 64
    %v1816 = vpop.permute.xlu0 %1815
    %1817 = vrot.lane.b32.xlu0 %v1726, 64
    %v1818 = vpop.permute.xlu0 %1817
    %1819 = vrot.lane.b32.xlu0 %v1727, 64
    %v1820 = vpop.permute.xlu0 %1819
    %1821 = vrot.lane.b32.xlu0 %v1728, 64
    %v1822 = vpop.permute.xlu0 %1821
    %1823 = vrot.lane.b32.xlu0 %v1729, 64
    %v1824 = vpop.permute.xlu0 %1823
    %1825 = vrot.lane.b32.xlu0 %v1730, 64
    %v1826 = vpop.permute.xlu0 %1825
    %v1859 = vadd.f32 %v1539, %v1764
    %v1860 = vadd.f32 %v1540, %v1766
    %v1861 = vadd.f32 %v1541, %v1768
    %v1862 = vadd.f32 %v1542, %v1770
    %v1863 = vadd.f32 %v1543, %v1772
    %v1864 = vadd.f32 %v1544, %v1774
    %v1865 = vadd.f32 %v1545, %v1776
    %v1866 = vadd.f32 %v1546, %v1778
    %v1867 = vadd.f32 %v1547, %v1780
    %v1868 = vadd.f32 %v1548, %v1782
    %v1869 = vadd.f32 %v1549, %v1784
    %v1870 = vadd.f32 %v1550, %v1786
    %v1871 = vadd.f32 %v1551, %v1788
    %v1872 = vadd.f32 %v1552, %v1790
    %v1873 = vadd.f32 %v1553, %v1792
    %v1874 = vadd.f32 %v1554, %v1794
    %v1875 = vadd.f32 %v1555, %v1796
    %v1876 = vadd.f32 %v1556, %v1798
    %v1877 = vadd.f32 %v1557, %v1800
    %v1878 = vadd.f32 %v1558, %v1802
    %v1879 = vadd.f32 %v1559, %v1804
    %v1880 = vadd.f32 %v1560, %v1806
    %v1881 = vadd.f32 %v1561, %v1808
    %v1882 = vadd.f32 %v1562, %v1810
    %v1883 = vadd.f32 %v1563, %v1812
    %v1884 = vadd.f32 %v1564, %v1814
    %v1885 = vadd.f32 %v1565, %v1816
    %v1886 = vadd.f32 %v1566, %v1818
    %v1887 = vadd.f32 %v1567, %v1820
    %v1888 = vadd.f32 %v1568, %v1822
    %v1889 = vadd.f32 %v1569, %v1824
    %v1890 = vadd.f32 %v1570, %v1826
    %1891 = vset.pattern.permute.xlu0 3
    %1892 = vperm.xlu0 %1891, %v392
    %v1893 = vpop.permute.xlu0 %1892
    %1895 = vset.pattern.permute.xlu0 3
    %1896 = vperm.xlu0 %1895, %v393
    %v1897 = vpop.permute.xlu0 %1896
    %1899 = vset.pattern.permute.xlu0 3
    %1900 = vperm.xlu0 %1899, %v394
    %v1901 = vpop.permute.xlu0 %1900
    %1903 = vset.pattern.permute.xlu0 3
    %1904 = vperm.xlu0 %1903, %v395
    %v1905 = vpop.permute.xlu0 %1904
    %1907 = vset.pattern.permute.xlu0 3
    %1908 = vperm.xlu0 %1907, %v396
    %v1909 = vpop.permute.xlu0 %1908
    %1911 = vset.pattern.permute.xlu0 3
    %1912 = vperm.xlu0 %1911, %v397
    %v1913 = vpop.permute.xlu0 %1912
    %1915 = vset.pattern.permute.xlu0 3
    %1916 = vperm.xlu0 %1915, %v398
    %v1917 = vpop.permute.xlu0 %1916
    %1919 = vset.pattern.permute.xlu0 3
    %1920 = vperm.xlu0 %1919, %v399
    %v1921 = vpop.permute.xlu0 %1920
    %1923 = vset.pattern.permute.xlu0 3
    %1924 = vperm.xlu0 %1923, %v400
    %v1925 = vpop.permute.xlu0 %1924
    %1927 = vset.pattern.permute.xlu0 3
    %1928 = vperm.xlu0 %1927, %v401
    %v1929 = vpop.permute.xlu0 %1928
    %1931 = vset.pattern.permute.xlu0 3
    %1932 = vperm.xlu0 %1931, %v402
    %v1933 = vpop.permute.xlu0 %1932
    %1935 = vset.pattern.permute.xlu0 3
    %1936 = vperm.xlu0 %1935, %v403
    %v1937 = vpop.permute.xlu0 %1936
    %1939 = vset.pattern.permute.xlu0 3
    %1940 = vperm.xlu0 %1939, %v404
    %v1941 = vpop.permute.xlu0 %1940
    %1943 = vset.pattern.permute.xlu0 3
    %1944 = vperm.xlu0 %1943, %v405
    %v1945 = vpop.permute.xlu0 %1944
    %1947 = vset.pattern.permute.xlu0 3
    %1948 = vperm.xlu0 %1947, %v406
    %v1949 = vpop.permute.xlu0 %1948
    %1951 = vset.pattern.permute.xlu0 3
    %1952 = vperm.xlu0 %1951, %v407
    %v1953 = vpop.permute.xlu0 %1952
    %1955 = vset.pattern.permute.xlu0 3
    %1956 = vperm.xlu0 %1955, %v408
    %v1957 = vpop.permute.xlu0 %1956
    %1959 = vset.pattern.permute.xlu0 3
    %1960 = vperm.xlu0 %1959, %v409
    %v1961 = vpop.permute.xlu0 %1960
    %1963 = vset.pattern.permute.xlu0 3
    %1964 = vperm.xlu0 %1963, %v410
    %v1965 = vpop.permute.xlu0 %1964
    %1967 = vset.pattern.permute.xlu0 3
    %1968 = vperm.xlu0 %1967, %v411
    %v1969 = vpop.permute.xlu0 %1968
    %1971 = vset.pattern.permute.xlu0 3
    %1972 = vperm.xlu0 %1971, %v412
    %v1973 = vpop.permute.xlu0 %1972
    %1975 = vset.pattern.permute.xlu0 3
    %1976 = vperm.xlu0 %1975, %v413
    %v1977 = vpop.permute.xlu0 %1976
    %1979 = vset.pattern.permute.xlu0 3
    %1980 = vperm.xlu0 %1979, %v414
    %v1981 = vpop.permute.xlu0 %1980
    %1983 = vset.pattern.permute.xlu0 3
    %1984 = vperm.xlu0 %1983, %v415
    %v1985 = vpop.permute.xlu0 %1984
    %1987 = vset.pattern.permute.xlu0 3
    %1988 = vperm.xlu0 %1987, %v416
    %v1989 = vpop.permute.xlu0 %1988
    %1991 = vset.pattern.permute.xlu0 3
    %1992 = vperm.xlu0 %1991, %v417
    %v1993 = vpop.permute.xlu0 %1992
    %1995 = vset.pattern.permute.xlu0 3
    %1996 = vperm.xlu0 %1995, %v418
    %v1997 = vpop.permute.xlu0 %1996
    %1999 = vset.pattern.permute.xlu0 3
    %2000 = vperm.xlu0 %1999, %v419
    %v2001 = vpop.permute.xlu0 %2000
    %2003 = vset.pattern.permute.xlu0 3
    %2004 = vperm.xlu0 %2003, %v420
    %v2005 = vpop.permute.xlu0 %2004
    %2007 = vset.pattern.permute.xlu0 3
    %2008 = vperm.xlu0 %2007, %v421
    %v2009 = vpop.permute.xlu0 %2008
    %2011 = vset.pattern.permute.xlu0 3
    %2012 = vperm.xlu0 %2011, %v422
    %v2013 = vpop.permute.xlu0 %2012
    %2015 = vset.pattern.permute.xlu0 3
    %2016 = vperm.xlu0 %2015, %v423
    %v2017 = vpop.permute.xlu0 %2016
    %v2019 = vmul.f32 %v1893, %v636
    %v2020 = vmul.f32 %v1897, %v642
    %v2021 = vmul.f32 %v1901, %v648
    %v2022 = vmul.f32 %v1905, %v654
    %v2023 = vmul.f32 %v1909, %v660
    %v2024 = vmul.f32 %v1913, %v666
    %v2025 = vmul.f32 %v1917, %v672
    %v2026 = vmul.f32 %v1921, %v678
    %v2027 = vmul.f32 %v1925, %v684
    %v2028 = vmul.f32 %v1929, %v690
    %v2029 = vmul.f32 %v1933, %v696
    %v2030 = vmul.f32 %v1937, %v702
    %v2031 = vmul.f32 %v1941, %v708
    %v2032 = vmul.f32 %v1945, %v714
    %v2033 = vmul.f32 %v1949, %v720
    %v2034 = vmul.f32 %v1953, %v726
    %v2035 = vmul.f32 %v1957, %v732
    %v2036 = vmul.f32 %v1961, %v738
    %v2037 = vmul.f32 %v1965, %v744
    %v2038 = vmul.f32 %v1969, %v750
    %v2039 = vmul.f32 %v1973, %v756
    %v2040 = vmul.f32 %v1977, %v762
    %v2041 = vmul.f32 %v1981, %v768
    %v2042 = vmul.f32 %v1985, %v774
    %v2043 = vmul.f32 %v1989, %v780
    %v2044 = vmul.f32 %v1993, %v786
    %v2045 = vmul.f32 %v1997, %v792
    %v2046 = vmul.f32 %v2001, %v798
    %v2047 = vmul.f32 %v2005, %v804
    %v2048 = vmul.f32 %v2009, %v810
    %v2049 = vmul.f32 %v2013, %v816
    %v2050 = vmul.f32 %v2017, %v822
    %2083 = vrot.lane.b32.xlu0 %v2019, 32
    %v2084 = vpop.permute.xlu0 %2083
    %2085 = vrot.lane.b32.xlu0 %v2020, 32
    %v2086 = vpop.permute.xlu0 %2085
    %2087 = vrot.lane.b32.xlu0 %v2021, 32
    %v2088 = vpop.permute.xlu0 %2087
    %2089 = vrot.lane.b32.xlu0 %v2022, 32
    %v2090 = vpop.permute.xlu0 %2089
    %2091 = vrot.lane.b32.xlu0 %v2023, 32
    %v2092 = vpop.permute.xlu0 %2091
    %2093 = vrot.lane.b32.xlu0 %v2024, 32
    %v2094 = vpop.permute.xlu0 %2093
    %2095 = vrot.lane.b32.xlu0 %v2025, 32
    %v2096 = vpop.permute.xlu0 %2095
    %2097 = vrot.lane.b32.xlu0 %v2026, 32
    %v2098 = vpop.permute.xlu0 %2097
    %2099 = vrot.lane.b32.xlu0 %v2027, 32
    %v2100 = vpop.permute.xlu0 %2099
    %2101 = vrot.lane.b32.xlu0 %v2028, 32
    %v2102 = vpop.permute.xlu0 %2101
    %2103 = vrot.lane.b32.xlu0 %v2029, 32
    %v2104 = vpop.permute.xlu0 %2103
    %2105 = vrot.lane.b32.xlu0 %v2030, 32
    %v2106 = vpop.permute.xlu0 %2105
    %2107 = vrot.lane.b32.xlu0 %v2031, 32
    %v2108 = vpop.permute.xlu0 %2107
    %2109 = vrot.lane.b32.xlu0 %v2032, 32
    %v2110 = vpop.permute.xlu0 %2109
    %2111 = vrot.lane.b32.xlu0 %v2033, 32
    %v2112 = vpop.permute.xlu0 %2111
    %2113 = vrot.lane.b32.xlu0 %v2034, 32
    %v2114 = vpop.permute.xlu0 %2113
    %2115 = vrot.lane.b32.xlu0 %v2035, 32
    %v2116 = vpop.permute.xlu0 %2115
    %2117 = vrot.lane.b32.xlu0 %v2036, 32
    %v2118 = vpop.permute.xlu0 %2117
    %2119 = vrot.lane.b32.xlu0 %v2037, 32
    %v2120 = vpop.permute.xlu0 %2119
    %2121 = vrot.lane.b32.xlu0 %v2038, 32
    %v2122 = vpop.permute.xlu0 %2121
    %2123 = vrot.lane.b32.xlu0 %v2039, 32
    %v2124 = vpop.permute.xlu0 %2123
    %2125 = vrot.lane.b32.xlu0 %v2040, 32
    %v2126 = vpop.permute.xlu0 %2125
    %2127 = vrot.lane.b32.xlu0 %v2041, 32
    %v2128 = vpop.permute.xlu0 %2127
    %2129 = vrot.lane.b32.xlu0 %v2042, 32
    %v2130 = vpop.permute.xlu0 %2129
    %2131 = vrot.lane.b32.xlu0 %v2043, 32
    %v2132 = vpop.permute.xlu0 %2131
    %2133 = vrot.lane.b32.xlu0 %v2044, 32
    %v2134 = vpop.permute.xlu0 %2133
    %2135 = vrot.lane.b32.xlu0 %v2045, 32
    %v2136 = vpop.permute.xlu0 %2135
    %2137 = vrot.lane.b32.xlu0 %v2046, 32
    %v2138 = vpop.permute.xlu0 %2137
    %2139 = vrot.lane.b32.xlu0 %v2047, 32
    %v2140 = vpop.permute.xlu0 %2139
    %2141 = vrot.lane.b32.xlu0 %v2048, 32
    %v2142 = vpop.permute.xlu0 %2141
    %2143 = vrot.lane.b32.xlu0 %v2049, 32
    %v2144 = vpop.permute.xlu0 %2143
    %2145 = vrot.lane.b32.xlu0 %v2050, 32
    %v2146 = vpop.permute.xlu0 %2145
    %v2179 = vadd.f32 %v1859, %v2084
    %v2180 = vadd.f32 %v1860, %v2086
    %v2181 = vadd.f32 %v1861, %v2088
    %v2182 = vadd.f32 %v1862, %v2090
    %v2183 = vadd.f32 %v1863, %v2092
    %v2184 = vadd.f32 %v1864, %v2094
    %v2185 = vadd.f32 %v1865, %v2096
    %v2186 = vadd.f32 %v1866, %v2098
    %v2187 = vadd.f32 %v1867, %v2100
    %v2188 = vadd.f32 %v1868, %v2102
    %v2189 = vadd.f32 %v1869, %v2104
    %v2190 = vadd.f32 %v1870, %v2106
    %v2191 = vadd.f32 %v1871, %v2108
    %v2192 = vadd.f32 %v1872, %v2110
    %v2193 = vadd.f32 %v1873, %v2112
    %v2194 = vadd.f32 %v1874, %v2114
    %v2195 = vadd.f32 %v1875, %v2116
    %v2196 = vadd.f32 %v1876, %v2118
    %v2197 = vadd.f32 %v1877, %v2120
    %v2198 = vadd.f32 %v1878, %v2122
    %v2199 = vadd.f32 %v1879, %v2124
    %v2200 = vadd.f32 %v1880, %v2126
    %v2201 = vadd.f32 %v1881, %v2128
    %v2202 = vadd.f32 %v1882, %v2130
    %v2203 = vadd.f32 %v1883, %v2132
    %v2204 = vadd.f32 %v1884, %v2134
    %v2205 = vadd.f32 %v1885, %v2136
    %v2206 = vadd.f32 %v1886, %v2138
    %v2207 = vadd.f32 %v1887, %v2140
    %v2208 = vadd.f32 %v1888, %v2142
    %v2209 = vadd.f32 %v1889, %v2144
    %v2210 = vadd.f32 %v1890, %v2146
    %2211 = vset.pattern.permute.xlu0 4
    %2212 = vperm.xlu0 %2211, %v392
    %v2213 = vpop.permute.xlu0 %2212
    %2215 = vset.pattern.permute.xlu0 4
    %2216 = vperm.xlu0 %2215, %v393
    %v2217 = vpop.permute.xlu0 %2216
    %2219 = vset.pattern.permute.xlu0 4
    %2220 = vperm.xlu0 %2219, %v394
    %v2221 = vpop.permute.xlu0 %2220
    %2223 = vset.pattern.permute.xlu0 4
    %2224 = vperm.xlu0 %2223, %v395
    %v2225 = vpop.permute.xlu0 %2224
    %2227 = vset.pattern.permute.xlu0 4
    %2228 = vperm.xlu0 %2227, %v396
    %v2229 = vpop.permute.xlu0 %2228
    %2231 = vset.pattern.permute.xlu0 4
    %2232 = vperm.xlu0 %2231, %v397
    %v2233 = vpop.permute.xlu0 %2232
    %2235 = vset.pattern.permute.xlu0 4
    %2236 = vperm.xlu0 %2235, %v398
    %v2237 = vpop.permute.xlu0 %2236
    %2239 = vset.pattern.permute.xlu0 4
    %2240 = vperm.xlu0 %2239, %v399
    %v2241 = vpop.permute.xlu0 %2240
    %2243 = vset.pattern.permute.xlu0 4
    %2244 = vperm.xlu0 %2243, %v400
    %v2245 = vpop.permute.xlu0 %2244
    %2247 = vset.pattern.permute.xlu0 4
    %2248 = vperm.xlu0 %2247, %v401
    %v2249 = vpop.permute.xlu0 %2248
    %2251 = vset.pattern.permute.xlu0 4
    %2252 = vperm.xlu0 %2251, %v402
    %v2253 = vpop.permute.xlu0 %2252
    %2255 = vset.pattern.permute.xlu0 4
    %2256 = vperm.xlu0 %2255, %v403
    %v2257 = vpop.permute.xlu0 %2256
    %2259 = vset.pattern.permute.xlu0 4
    %2260 = vperm.xlu0 %2259, %v404
    %v2261 = vpop.permute.xlu0 %2260
    %2263 = vset.pattern.permute.xlu0 4
    %2264 = vperm.xlu0 %2263, %v405
    %v2265 = vpop.permute.xlu0 %2264
    %2267 = vset.pattern.permute.xlu0 4
    %2268 = vperm.xlu0 %2267, %v406
    %v2269 = vpop.permute.xlu0 %2268
    %2271 = vset.pattern.permute.xlu0 4
    %2272 = vperm.xlu0 %2271, %v407
    %v2273 = vpop.permute.xlu0 %2272
    %2275 = vset.pattern.permute.xlu0 4
    %2276 = vperm.xlu0 %2275, %v408
    %v2277 = vpop.permute.xlu0 %2276
    %2279 = vset.pattern.permute.xlu0 4
    %2280 = vperm.xlu0 %2279, %v409
    %v2281 = vpop.permute.xlu0 %2280
    %2283 = vset.pattern.permute.xlu0 4
    %2284 = vperm.xlu0 %2283, %v410
    %v2285 = vpop.permute.xlu0 %2284
    %2287 = vset.pattern.permute.xlu0 4
    %2288 = vperm.xlu0 %2287, %v411
    %v2289 = vpop.permute.xlu0 %2288
    %2291 = vset.pattern.permute.xlu0 4
    %2292 = vperm.xlu0 %2291, %v412
    %v2293 = vpop.permute.xlu0 %2292
    %2295 = vset.pattern.permute.xlu0 4
    %2296 = vperm.xlu0 %2295, %v413
    %v2297 = vpop.permute.xlu0 %2296
    %2299 = vset.pattern.permute.xlu0 4
    %2300 = vperm.xlu0 %2299, %v414
    %v2301 = vpop.permute.xlu0 %2300
    %2303 = vset.pattern.permute.xlu0 4
    %2304 = vperm.xlu0 %2303, %v415
    %v2305 = vpop.permute.xlu0 %2304
    %2307 = vset.pattern.permute.xlu0 4
    %2308 = vperm.xlu0 %2307, %v416
    %v2309 = vpop.permute.xlu0 %2308
    %2311 = vset.pattern.permute.xlu0 4
    %2312 = vperm.xlu0 %2311, %v417
    %v2313 = vpop.permute.xlu0 %2312
    %2315 = vset.pattern.permute.xlu0 4
    %2316 = vperm.xlu0 %2315, %v418
    %v2317 = vpop.permute.xlu0 %2316
    %2319 = vset.pattern.permute.xlu0 4
    %2320 = vperm.xlu0 %2319, %v419
    %v2321 = vpop.permute.xlu0 %2320
    %2323 = vset.pattern.permute.xlu0 4
    %2324 = vperm.xlu0 %2323, %v420
    %v2325 = vpop.permute.xlu0 %2324
    %2327 = vset.pattern.permute.xlu0 4
    %2328 = vperm.xlu0 %2327, %v421
    %v2329 = vpop.permute.xlu0 %2328
    %2331 = vset.pattern.permute.xlu0 4
    %2332 = vperm.xlu0 %2331, %v422
    %v2333 = vpop.permute.xlu0 %2332
    %2335 = vset.pattern.permute.xlu0 4
    %2336 = vperm.xlu0 %2335, %v423
    %v2337 = vpop.permute.xlu0 %2336
    %v2339 = vmul.f32 %v2213, %v638
    %v2340 = vmul.f32 %v2217, %v644
    %v2341 = vmul.f32 %v2221, %v650
    %v2342 = vmul.f32 %v2225, %v656
    %v2343 = vmul.f32 %v2229, %v662
    %v2344 = vmul.f32 %v2233, %v668
    %v2345 = vmul.f32 %v2237, %v674
    %v2346 = vmul.f32 %v2241, %v680
    %v2347 = vmul.f32 %v2245, %v686
    %v2348 = vmul.f32 %v2249, %v692
    %v2349 = vmul.f32 %v2253, %v698
    %v2350 = vmul.f32 %v2257, %v704
    %v2351 = vmul.f32 %v2261, %v710
    %v2352 = vmul.f32 %v2265, %v716
    %v2353 = vmul.f32 %v2269, %v722
    %v2354 = vmul.f32 %v2273, %v728
    %v2355 = vmul.f32 %v2277, %v734
    %v2356 = vmul.f32 %v2281, %v740
    %v2357 = vmul.f32 %v2285, %v746
    %v2358 = vmul.f32 %v2289, %v752
    %v2359 = vmul.f32 %v2293, %v758
    %v2360 = vmul.f32 %v2297, %v764
    %v2361 = vmul.f32 %v2301, %v770
    %v2362 = vmul.f32 %v2305, %v776
    %v2363 = vmul.f32 %v2309, %v782
    %v2364 = vmul.f32 %v2313, %v788
    %v2365 = vmul.f32 %v2317, %v794
    %v2366 = vmul.f32 %v2321, %v800
    %v2367 = vmul.f32 %v2325, %v806
    %v2368 = vmul.f32 %v2329, %v812
    %v2369 = vmul.f32 %v2333, %v818
    %v2370 = vmul.f32 %v2337, %v824
    %v2371 = vadd.f32 %v2179, %v2339
    %v2372 = vadd.f32 %v2180, %v2340
    %v2373 = vadd.f32 %v2181, %v2341
    %v2374 = vadd.f32 %v2182, %v2342
    %v2375 = vadd.f32 %v2183, %v2343
    %v2376 = vadd.f32 %v2184, %v2344
    %v2377 = vadd.f32 %v2185, %v2345
    %v2378 = vadd.f32 %v2186, %v2346
    %v2379 = vadd.f32 %v2187, %v2347
    %v2380 = vadd.f32 %v2188, %v2348
    %v2381 = vadd.f32 %v2189, %v2349
    %v2382 = vadd.f32 %v2190, %v2350
    %v2383 = vadd.f32 %v2191, %v2351
    %v2384 = vadd.f32 %v2192, %v2352
    %v2385 = vadd.f32 %v2193, %v2353
    %v2386 = vadd.f32 %v2194, %v2354
    %v2387 = vadd.f32 %v2195, %v2355
    %v2388 = vadd.f32 %v2196, %v2356
    %v2389 = vadd.f32 %v2197, %v2357
    %v2390 = vadd.f32 %v2198, %v2358
    %v2391 = vadd.f32 %v2199, %v2359
    %v2392 = vadd.f32 %v2200, %v2360
    %v2393 = vadd.f32 %v2201, %v2361
    %v2394 = vadd.f32 %v2202, %v2362
    %v2395 = vadd.f32 %v2203, %v2363
    %v2396 = vadd.f32 %v2204, %v2364
    %v2397 = vadd.f32 %v2205, %v2365
    %v2398 = vadd.f32 %v2206, %v2366
    %v2399 = vadd.f32 %v2207, %v2367
    %v2400 = vadd.f32 %v2208, %v2368
    %v2401 = vadd.f32 %v2209, %v2369
    %v2402 = vadd.f32 %v2210, %v2370
    %2403 = vset.pattern.permute.xlu0 5
    %2404 = vperm.xlu0 %2403, %v392
    %v2405 = vpop.permute.xlu0 %2404
    %2407 = vset.pattern.permute.xlu0 5
    %2408 = vperm.xlu0 %2407, %v393
    %v2409 = vpop.permute.xlu0 %2408
    %2411 = vset.pattern.permute.xlu0 5
    %2412 = vperm.xlu0 %2411, %v394
    %v2413 = vpop.permute.xlu0 %2412
    %2415 = vset.pattern.permute.xlu0 5
    %2416 = vperm.xlu0 %2415, %v395
    %v2417 = vpop.permute.xlu0 %2416
    %2419 = vset.pattern.permute.xlu0 5
    %2420 = vperm.xlu0 %2419, %v396
    %v2421 = vpop.permute.xlu0 %2420
    %2423 = vset.pattern.permute.xlu0 5
    %2424 = vperm.xlu0 %2423, %v397
    %v2425 = vpop.permute.xlu0 %2424
    %2427 = vset.pattern.permute.xlu0 5
    %2428 = vperm.xlu0 %2427, %v398
    %v2429 = vpop.permute.xlu0 %2428
    %2431 = vset.pattern.permute.xlu0 5
    %2432 = vperm.xlu0 %2431, %v399
    %v2433 = vpop.permute.xlu0 %2432
    %2435 = vset.pattern.permute.xlu0 5
    %2436 = vperm.xlu0 %2435, %v400
    %v2437 = vpop.permute.xlu0 %2436
    %2439 = vset.pattern.permute.xlu0 5
    %2440 = vperm.xlu0 %2439, %v401
    %v2441 = vpop.permute.xlu0 %2440
    %2443 = vset.pattern.permute.xlu0 5
    %2444 = vperm.xlu0 %2443, %v402
    %v2445 = vpop.permute.xlu0 %2444
    %2447 = vset.pattern.permute.xlu0 5
    %2448 = vperm.xlu0 %2447, %v403
    %v2449 = vpop.permute.xlu0 %2448
    %2451 = vset.pattern.permute.xlu0 5
    %2452 = vperm.xlu0 %2451, %v404
    %v2453 = vpop.permute.xlu0 %2452
    %2455 = vset.pattern.permute.xlu0 5
    %2456 = vperm.xlu0 %2455, %v405
    %v2457 = vpop.permute.xlu0 %2456
    %2459 = vset.pattern.permute.xlu0 5
    %2460 = vperm.xlu0 %2459, %v406
    %v2461 = vpop.permute.xlu0 %2460
    %2463 = vset.pattern.permute.xlu0 5
    %2464 = vperm.xlu0 %2463, %v407
    %v2465 = vpop.permute.xlu0 %2464
    %2467 = vset.pattern.permute.xlu0 5
    %2468 = vperm.xlu0 %2467, %v408
    %v2469 = vpop.permute.xlu0 %2468
    %2471 = vset.pattern.permute.xlu0 5
    %2472 = vperm.xlu0 %2471, %v409
    %v2473 = vpop.permute.xlu0 %2472
    %2475 = vset.pattern.permute.xlu0 5
    %2476 = vperm.xlu0 %2475, %v410
    %v2477 = vpop.permute.xlu0 %2476
    %2479 = vset.pattern.permute.xlu0 5
    %2480 = vperm.xlu0 %2479, %v411
    %v2481 = vpop.permute.xlu0 %2480
    %2483 = vset.pattern.permute.xlu0 5
    %2484 = vperm.xlu0 %2483, %v412
    %v2485 = vpop.permute.xlu0 %2484
    %2487 = vset.pattern.permute.xlu0 5
    %2488 = vperm.xlu0 %2487, %v413
    %v2489 = vpop.permute.xlu0 %2488
    %2491 = vset.pattern.permute.xlu0 5
    %2492 = vperm.xlu0 %2491, %v414
    %v2493 = vpop.permute.xlu0 %2492
    %2495 = vset.pattern.permute.xlu0 5
    %2496 = vperm.xlu0 %2495, %v415
    %v2497 = vpop.permute.xlu0 %2496
    %2499 = vset.pattern.permute.xlu0 5
    %2500 = vperm.xlu0 %2499, %v416
    %v2501 = vpop.permute.xlu0 %2500
    %2503 = vset.pattern.permute.xlu0 5
    %2504 = vperm.xlu0 %2503, %v417
    %v2505 = vpop.permute.xlu0 %2504
    %2507 = vset.pattern.permute.xlu0 5
    %2508 = vperm.xlu0 %2507, %v418
    %v2509 = vpop.permute.xlu0 %2508
    %2511 = vset.pattern.permute.xlu0 5
    %2512 = vperm.xlu0 %2511, %v419
    %v2513 = vpop.permute.xlu0 %2512
    %2515 = vset.pattern.permute.xlu0 5
    %2516 = vperm.xlu0 %2515, %v420
    %v2517 = vpop.permute.xlu0 %2516
    %2519 = vset.pattern.permute.xlu0 5
    %2520 = vperm.xlu0 %2519, %v421
    %v2521 = vpop.permute.xlu0 %2520
    %2523 = vset.pattern.permute.xlu0 5
    %2524 = vperm.xlu0 %2523, %v422
    %v2525 = vpop.permute.xlu0 %2524
    %2527 = vset.pattern.permute.xlu0 5
    %2528 = vperm.xlu0 %2527, %v423
    %v2529 = vpop.permute.xlu0 %2528
    %v2531 = vmul.f32 %v2405, %v638
    %v2532 = vmul.f32 %v2409, %v644
    %v2533 = vmul.f32 %v2413, %v650
    %v2534 = vmul.f32 %v2417, %v656
    %v2535 = vmul.f32 %v2421, %v662
    %v2536 = vmul.f32 %v2425, %v668
    %v2537 = vmul.f32 %v2429, %v674
    %v2538 = vmul.f32 %v2433, %v680
    %v2539 = vmul.f32 %v2437, %v686
    %v2540 = vmul.f32 %v2441, %v692
    %v2541 = vmul.f32 %v2445, %v698
    %v2542 = vmul.f32 %v2449, %v704
    %v2543 = vmul.f32 %v2453, %v710
    %v2544 = vmul.f32 %v2457, %v716
    %v2545 = vmul.f32 %v2461, %v722
    %v2546 = vmul.f32 %v2465, %v728
    %v2547 = vmul.f32 %v2469, %v734
    %v2548 = vmul.f32 %v2473, %v740
    %v2549 = vmul.f32 %v2477, %v746
    %v2550 = vmul.f32 %v2481, %v752
    %v2551 = vmul.f32 %v2485, %v758
    %v2552 = vmul.f32 %v2489, %v764
    %v2553 = vmul.f32 %v2493, %v770
    %v2554 = vmul.f32 %v2497, %v776
    %v2555 = vmul.f32 %v2501, %v782
    %v2556 = vmul.f32 %v2505, %v788
    %v2557 = vmul.f32 %v2509, %v794
    %v2558 = vmul.f32 %v2513, %v800
    %v2559 = vmul.f32 %v2517, %v806
    %v2560 = vmul.f32 %v2521, %v812
    %v2561 = vmul.f32 %v2525, %v818
    %v2562 = vmul.f32 %v2529, %v824
    %2595 = vrot.lane.b32.xlu0 %v2531, 96
    %v2596 = vpop.permute.xlu0 %2595
    %2597 = vrot.lane.b32.xlu0 %v2532, 96
    %v2598 = vpop.permute.xlu0 %2597
    %2599 = vrot.lane.b32.xlu0 %v2533, 96
    %v2600 = vpop.permute.xlu0 %2599
    %2601 = vrot.lane.b32.xlu0 %v2534, 96
    %v2602 = vpop.permute.xlu0 %2601
    %2603 = vrot.lane.b32.xlu0 %v2535, 96
    %v2604 = vpop.permute.xlu0 %2603
    %2605 = vrot.lane.b32.xlu0 %v2536, 96
    %v2606 = vpop.permute.xlu0 %2605
    %2607 = vrot.lane.b32.xlu0 %v2537, 96
    %v2608 = vpop.permute.xlu0 %2607
    %2609 = vrot.lane.b32.xlu0 %v2538, 96
    %v2610 = vpop.permute.xlu0 %2609
    %2611 = vrot.lane.b32.xlu0 %v2539, 96
    %v2612 = vpop.permute.xlu0 %2611
    %2613 = vrot.lane.b32.xlu0 %v2540, 96
    %v2614 = vpop.permute.xlu0 %2613
    %2615 = vrot.lane.b32.xlu0 %v2541, 96
    %v2616 = vpop.permute.xlu0 %2615
    %2617 = vrot.lane.b32.xlu0 %v2542, 96
    %v2618 = vpop.permute.xlu0 %2617
    %2619 = vrot.lane.b32.xlu0 %v2543, 96
    %v2620 = vpop.permute.xlu0 %2619
    %2621 = vrot.lane.b32.xlu0 %v2544, 96
    %v2622 = vpop.permute.xlu0 %2621
    %2623 = vrot.lane.b32.xlu0 %v2545, 96
    %v2624 = vpop.permute.xlu0 %2623
    %2625 = vrot.lane.b32.xlu0 %v2546, 96
    %v2626 = vpop.permute.xlu0 %2625
    %2627 = vrot.lane.b32.xlu0 %v2547, 96
    %v2628 = vpop.permute.xlu0 %2627
    %2629 = vrot.lane.b32.xlu0 %v2548, 96
    %v2630 = vpop.permute.xlu0 %2629
    %2631 = vrot.lane.b32.xlu0 %v2549, 96
    %v2632 = vpop.permute.xlu0 %2631
    %2633 = vrot.lane.b32.xlu0 %v2550, 96
    %v2634 = vpop.permute.xlu0 %2633
    %2635 = vrot.lane.b32.xlu0 %v2551, 96
    %v2636 = vpop.permute.xlu0 %2635
    %2637 = vrot.lane.b32.xlu0 %v2552, 96
    %v2638 = vpop.permute.xlu0 %2637
    %2639 = vrot.lane.b32.xlu0 %v2553, 96
    %v2640 = vpop.permute.xlu0 %2639
    %2641 = vrot.lane.b32.xlu0 %v2554, 96
    %v2642 = vpop.permute.xlu0 %2641
    %2643 = vrot.lane.b32.xlu0 %v2555, 96
    %v2644 = vpop.permute.xlu0 %2643
    %2645 = vrot.lane.b32.xlu0 %v2556, 96
    %v2646 = vpop.permute.xlu0 %2645
    %2647 = vrot.lane.b32.xlu0 %v2557, 96
    %v2648 = vpop.permute.xlu0 %2647
    %2649 = vrot.lane.b32.xlu0 %v2558, 96
    %v2650 = vpop.permute.xlu0 %2649
    %2651 = vrot.lane.b32.xlu0 %v2559, 96
    %v2652 = vpop.permute.xlu0 %2651
    %2653 = vrot.lane.b32.xlu0 %v2560, 96
    %v2654 = vpop.permute.xlu0 %2653
    %2655 = vrot.lane.b32.xlu0 %v2561, 96
    %v2656 = vpop.permute.xlu0 %2655
    %2657 = vrot.lane.b32.xlu0 %v2562, 96
    %v2658 = vpop.permute.xlu0 %2657
    %v2691 = vadd.f32 %v2371, %v2596
    %v2692 = vadd.f32 %v2372, %v2598
    %v2693 = vadd.f32 %v2373, %v2600
    %v2694 = vadd.f32 %v2374, %v2602
    %v2695 = vadd.f32 %v2375, %v2604
    %v2696 = vadd.f32 %v2376, %v2606
    %v2697 = vadd.f32 %v2377, %v2608
    %v2698 = vadd.f32 %v2378, %v2610
    %v2699 = vadd.f32 %v2379, %v2612
    %v2700 = vadd.f32 %v2380, %v2614
    %v2701 = vadd.f32 %v2381, %v2616
    %v2702 = vadd.f32 %v2382, %v2618
    %v2703 = vadd.f32 %v2383, %v2620
    %v2704 = vadd.f32 %v2384, %v2622
    %v2705 = vadd.f32 %v2385, %v2624
    %v2706 = vadd.f32 %v2386, %v2626
    %v2707 = vadd.f32 %v2387, %v2628
    %v2708 = vadd.f32 %v2388, %v2630
    %v2709 = vadd.f32 %v2389, %v2632
    %v2710 = vadd.f32 %v2390, %v2634
    %v2711 = vadd.f32 %v2391, %v2636
    %v2712 = vadd.f32 %v2392, %v2638
    %v2713 = vadd.f32 %v2393, %v2640
    %v2714 = vadd.f32 %v2394, %v2642
    %v2715 = vadd.f32 %v2395, %v2644
    %v2716 = vadd.f32 %v2396, %v2646
    %v2717 = vadd.f32 %v2397, %v2648
    %v2718 = vadd.f32 %v2398, %v2650
    %v2719 = vadd.f32 %v2399, %v2652
    %v2720 = vadd.f32 %v2400, %v2654
    %v2721 = vadd.f32 %v2401, %v2656
    %v2722 = vadd.f32 %v2402, %v2658
    %2723 = vset.pattern.permute.xlu0 6
    %2724 = vperm.xlu0 %2723, %v392
    %v2725 = vpop.permute.xlu0 %2724
    %2727 = vset.pattern.permute.xlu0 6
    %2728 = vperm.xlu0 %2727, %v393
    %v2729 = vpop.permute.xlu0 %2728
    %2731 = vset.pattern.permute.xlu0 6
    %2732 = vperm.xlu0 %2731, %v394
    %v2733 = vpop.permute.xlu0 %2732
    %2735 = vset.pattern.permute.xlu0 6
    %2736 = vperm.xlu0 %2735, %v395
    %v2737 = vpop.permute.xlu0 %2736
    %2739 = vset.pattern.permute.xlu0 6
    %2740 = vperm.xlu0 %2739, %v396
    %v2741 = vpop.permute.xlu0 %2740
    %2743 = vset.pattern.permute.xlu0 6
    %2744 = vperm.xlu0 %2743, %v397
    %v2745 = vpop.permute.xlu0 %2744
    %2747 = vset.pattern.permute.xlu0 6
    %2748 = vperm.xlu0 %2747, %v398
    %v2749 = vpop.permute.xlu0 %2748
    %2751 = vset.pattern.permute.xlu0 6
    %2752 = vperm.xlu0 %2751, %v399
    %v2753 = vpop.permute.xlu0 %2752
    %2755 = vset.pattern.permute.xlu0 6
    %2756 = vperm.xlu0 %2755, %v400
    %v2757 = vpop.permute.xlu0 %2756
    %2759 = vset.pattern.permute.xlu0 6
    %2760 = vperm.xlu0 %2759, %v401
    %v2761 = vpop.permute.xlu0 %2760
    %2763 = vset.pattern.permute.xlu0 6
    %2764 = vperm.xlu0 %2763, %v402
    %v2765 = vpop.permute.xlu0 %2764
    %2767 = vset.pattern.permute.xlu0 6
    %2768 = vperm.xlu0 %2767, %v403
    %v2769 = vpop.permute.xlu0 %2768
    %2771 = vset.pattern.permute.xlu0 6
    %2772 = vperm.xlu0 %2771, %v404
    %v2773 = vpop.permute.xlu0 %2772
    %2775 = vset.pattern.permute.xlu0 6
    %2776 = vperm.xlu0 %2775, %v405
    %v2777 = vpop.permute.xlu0 %2776
    %2779 = vset.pattern.permute.xlu0 6
    %2780 = vperm.xlu0 %2779, %v406
    %v2781 = vpop.permute.xlu0 %2780
    %2783 = vset.pattern.permute.xlu0 6
    %2784 = vperm.xlu0 %2783, %v407
    %v2785 = vpop.permute.xlu0 %2784
    %2787 = vset.pattern.permute.xlu0 6
    %2788 = vperm.xlu0 %2787, %v408
    %v2789 = vpop.permute.xlu0 %2788
    %2791 = vset.pattern.permute.xlu0 6
    %2792 = vperm.xlu0 %2791, %v409
    %v2793 = vpop.permute.xlu0 %2792
    %2795 = vset.pattern.permute.xlu0 6
    %2796 = vperm.xlu0 %2795, %v410
    %v2797 = vpop.permute.xlu0 %2796
    %2799 = vset.pattern.permute.xlu0 6
    %2800 = vperm.xlu0 %2799, %v411
    %v2801 = vpop.permute.xlu0 %2800
    %2803 = vset.pattern.permute.xlu0 6
    %2804 = vperm.xlu0 %2803, %v412
    %v2805 = vpop.permute.xlu0 %2804
    %2807 = vset.pattern.permute.xlu0 6
    %2808 = vperm.xlu0 %2807, %v413
    %v2809 = vpop.permute.xlu0 %2808
    %2811 = vset.pattern.permute.xlu0 6
    %2812 = vperm.xlu0 %2811, %v414
    %v2813 = vpop.permute.xlu0 %2812
    %2815 = vset.pattern.permute.xlu0 6
    %2816 = vperm.xlu0 %2815, %v415
    %v2817 = vpop.permute.xlu0 %2816
    %2819 = vset.pattern.permute.xlu0 6
    %2820 = vperm.xlu0 %2819, %v416
    %v2821 = vpop.permute.xlu0 %2820
    %2823 = vset.pattern.permute.xlu0 6
    %2824 = vperm.xlu0 %2823, %v417
    %v2825 = vpop.permute.xlu0 %2824
    %2827 = vset.pattern.permute.xlu0 6
    %2828 = vperm.xlu0 %2827, %v418
    %v2829 = vpop.permute.xlu0 %2828
    %2831 = vset.pattern.permute.xlu0 6
    %2832 = vperm.xlu0 %2831, %v419
    %v2833 = vpop.permute.xlu0 %2832
    %2835 = vset.pattern.permute.xlu0 6
    %2836 = vperm.xlu0 %2835, %v420
    %v2837 = vpop.permute.xlu0 %2836
    %2839 = vset.pattern.permute.xlu0 6
    %2840 = vperm.xlu0 %2839, %v421
    %v2841 = vpop.permute.xlu0 %2840
    %2843 = vset.pattern.permute.xlu0 6
    %2844 = vperm.xlu0 %2843, %v422
    %v2845 = vpop.permute.xlu0 %2844
    %2847 = vset.pattern.permute.xlu0 6
    %2848 = vperm.xlu0 %2847, %v423
    %v2849 = vpop.permute.xlu0 %2848
    %v2851 = vmul.f32 %v2725, %v638
    %v2852 = vmul.f32 %v2729, %v644
    %v2853 = vmul.f32 %v2733, %v650
    %v2854 = vmul.f32 %v2737, %v656
    %v2855 = vmul.f32 %v2741, %v662
    %v2856 = vmul.f32 %v2745, %v668
    %v2857 = vmul.f32 %v2749, %v674
    %v2858 = vmul.f32 %v2753, %v680
    %v2859 = vmul.f32 %v2757, %v686
    %v2860 = vmul.f32 %v2761, %v692
    %v2861 = vmul.f32 %v2765, %v698
    %v2862 = vmul.f32 %v2769, %v704
    %v2863 = vmul.f32 %v2773, %v710
    %v2864 = vmul.f32 %v2777, %v716
    %v2865 = vmul.f32 %v2781, %v722
    %v2866 = vmul.f32 %v2785, %v728
    %v2867 = vmul.f32 %v2789, %v734
    %v2868 = vmul.f32 %v2793, %v740
    %v2869 = vmul.f32 %v2797, %v746
    %v2870 = vmul.f32 %v2801, %v752
    %v2871 = vmul.f32 %v2805, %v758
    %v2872 = vmul.f32 %v2809, %v764
    %v2873 = vmul.f32 %v2813, %v770
    %v2874 = vmul.f32 %v2817, %v776
    %v2875 = vmul.f32 %v2821, %v782
    %v2876 = vmul.f32 %v2825, %v788
    %v2877 = vmul.f32 %v2829, %v794
    %v2878 = vmul.f32 %v2833, %v800
    %v2879 = vmul.f32 %v2837, %v806
    %v2880 = vmul.f32 %v2841, %v812
    %v2881 = vmul.f32 %v2845, %v818
    %v2882 = vmul.f32 %v2849, %v824
    %2915 = vrot.lane.b32.xlu0 %v2851, 64
    %v2916 = vpop.permute.xlu0 %2915
    %2917 = vrot.lane.b32.xlu0 %v2852, 64
    %v2918 = vpop.permute.xlu0 %2917
    %2919 = vrot.lane.b32.xlu0 %v2853, 64
    %v2920 = vpop.permute.xlu0 %2919
    %2921 = vrot.lane.b32.xlu0 %v2854, 64
    %v2922 = vpop.permute.xlu0 %2921
    %2923 = vrot.lane.b32.xlu0 %v2855, 64
    %v2924 = vpop.permute.xlu0 %2923
    %2925 = vrot.lane.b32.xlu0 %v2856, 64
    %v2926 = vpop.permute.xlu0 %2925
    %2927 = vrot.lane.b32.xlu0 %v2857, 64
    %v2928 = vpop.permute.xlu0 %2927
    %2929 = vrot.lane.b32.xlu0 %v2858, 64
    %v2930 = vpop.permute.xlu0 %2929
    %2931 = vrot.lane.b32.xlu0 %v2859, 64
    %v2932 = vpop.permute.xlu0 %2931
    %2933 = vrot.lane.b32.xlu0 %v2860, 64
    %v2934 = vpop.permute.xlu0 %2933
    %2935 = vrot.lane.b32.xlu0 %v2861, 64
    %v2936 = vpop.permute.xlu0 %2935
    %2937 = vrot.lane.b32.xlu0 %v2862, 64
    %v2938 = vpop.permute.xlu0 %2937
    %2939 = vrot.lane.b32.xlu0 %v2863, 64
    %v2940 = vpop.permute.xlu0 %2939
    %2941 = vrot.lane.b32.xlu0 %v2864, 64
    %v2942 = vpop.permute.xlu0 %2941
    %2943 = vrot.lane.b32.xlu0 %v2865, 64
    %v2944 = vpop.permute.xlu0 %2943
    %2945 = vrot.lane.b32.xlu0 %v2866, 64
    %v2946 = vpop.permute.xlu0 %2945
    %2947 = vrot.lane.b32.xlu0 %v2867, 64
    %v2948 = vpop.permute.xlu0 %2947
    %2949 = vrot.lane.b32.xlu0 %v2868, 64
    %v2950 = vpop.permute.xlu0 %2949
    %2951 = vrot.lane.b32.xlu0 %v2869, 64
    %v2952 = vpop.permute.xlu0 %2951
    %2953 = vrot.lane.b32.xlu0 %v2870, 64
    %v2954 = vpop.permute.xlu0 %2953
    %2955 = vrot.lane.b32.xlu0 %v2871, 64
    %v2956 = vpop.permute.xlu0 %2955
    %2957 = vrot.lane.b32.xlu0 %v2872, 64
    %v2958 = vpop.permute.xlu0 %2957
    %2959 = vrot.lane.b32.xlu0 %v2873, 64
    %v2960 = vpop.permute.xlu0 %2959
    %2961 = vrot.lane.b32.xlu0 %v2874, 64
    %v2962 = vpop.permute.xlu0 %2961
    %2963 = vrot.lane.b32.xlu0 %v2875, 64
    %v2964 = vpop.permute.xlu0 %2963
    %2965 = vrot.lane.b32.xlu0 %v2876, 64
    %v2966 = vpop.permute.xlu0 %2965
    %2967 = vrot.lane.b32.xlu0 %v2877, 64
    %v2968 = vpop.permute.xlu0 %2967
    %2969 = vrot.lane.b32.xlu0 %v2878, 64
    %v2970 = vpop.permute.xlu0 %2969
    %2971 = vrot.lane.b32.xlu0 %v2879, 64
    %v2972 = vpop.permute.xlu0 %2971
    %2973 = vrot.lane.b32.xlu0 %v2880, 64
    %v2974 = vpop.permute.xlu0 %2973
    %2975 = vrot.lane.b32.xlu0 %v2881, 64
    %v2976 = vpop.permute.xlu0 %2975
    %2977 = vrot.lane.b32.xlu0 %v2882, 64
    %v2978 = vpop.permute.xlu0 %2977
    %v3011 = vadd.f32 %v2691, %v2916
    %v3012 = vadd.f32 %v2692, %v2918
    %v3013 = vadd.f32 %v2693, %v2920
    %v3014 = vadd.f32 %v2694, %v2922
    %v3015 = vadd.f32 %v2695, %v2924
    %v3016 = vadd.f32 %v2696, %v2926
    %v3017 = vadd.f32 %v2697, %v2928
    %v3018 = vadd.f32 %v2698, %v2930
    %v3019 = vadd.f32 %v2699, %v2932
    %v3020 = vadd.f32 %v2700, %v2934
    %v3021 = vadd.f32 %v2701, %v2936
    %v3022 = vadd.f32 %v2702, %v2938
    %v3023 = vadd.f32 %v2703, %v2940
    %v3024 = vadd.f32 %v2704, %v2942
    %v3025 = vadd.f32 %v2705, %v2944
    %v3026 = vadd.f32 %v2706, %v2946
    %v3027 = vadd.f32 %v2707, %v2948
    %v3028 = vadd.f32 %v2708, %v2950
    %v3029 = vadd.f32 %v2709, %v2952
    %v3030 = vadd.f32 %v2710, %v2954
    %v3031 = vadd.f32 %v2711, %v2956
    %v3032 = vadd.f32 %v2712, %v2958
    %v3033 = vadd.f32 %v2713, %v2960
    %v3034 = vadd.f32 %v2714, %v2962
    %v3035 = vadd.f32 %v2715, %v2964
    %v3036 = vadd.f32 %v2716, %v2966
    %v3037 = vadd.f32 %v2717, %v2968
    %v3038 = vadd.f32 %v2718, %v2970
    %v3039 = vadd.f32 %v2719, %v2972
    %v3040 = vadd.f32 %v2720, %v2974
    %v3041 = vadd.f32 %v2721, %v2976
    %v3042 = vadd.f32 %v2722, %v2978
    %3043 = vset.pattern.permute.xlu0 7
    %3044 = vperm.xlu0 %3043, %v392
    %v3045 = vpop.permute.xlu0 %3044
    %3047 = vset.pattern.permute.xlu0 7
    %3048 = vperm.xlu0 %3047, %v393
    %v3049 = vpop.permute.xlu0 %3048
    %3051 = vset.pattern.permute.xlu0 7
    %3052 = vperm.xlu0 %3051, %v394
    %v3053 = vpop.permute.xlu0 %3052
    %3055 = vset.pattern.permute.xlu0 7
    %3056 = vperm.xlu0 %3055, %v395
    %v3057 = vpop.permute.xlu0 %3056
    %3059 = vset.pattern.permute.xlu0 7
    %3060 = vperm.xlu0 %3059, %v396
    %v3061 = vpop.permute.xlu0 %3060
    %3063 = vset.pattern.permute.xlu0 7
    %3064 = vperm.xlu0 %3063, %v397
    %v3065 = vpop.permute.xlu0 %3064
    %3067 = vset.pattern.permute.xlu0 7
    %3068 = vperm.xlu0 %3067, %v398
    %v3069 = vpop.permute.xlu0 %3068
    %3071 = vset.pattern.permute.xlu0 7
    %3072 = vperm.xlu0 %3071, %v399
    %v3073 = vpop.permute.xlu0 %3072
    %3075 = vset.pattern.permute.xlu0 7
    %3076 = vperm.xlu0 %3075, %v400
    %v3077 = vpop.permute.xlu0 %3076
    %3079 = vset.pattern.permute.xlu0 7
    %3080 = vperm.xlu0 %3079, %v401
    %v3081 = vpop.permute.xlu0 %3080
    %3083 = vset.pattern.permute.xlu0 7
    %3084 = vperm.xlu0 %3083, %v402
    %v3085 = vpop.permute.xlu0 %3084
    %3087 = vset.pattern.permute.xlu0 7
    %3088 = vperm.xlu0 %3087, %v403
    %v3089 = vpop.permute.xlu0 %3088
    %3091 = vset.pattern.permute.xlu0 7
    %3092 = vperm.xlu0 %3091, %v404
    %v3093 = vpop.permute.xlu0 %3092
    %3095 = vset.pattern.permute.xlu0 7
    %3096 = vperm.xlu0 %3095, %v405
    %v3097 = vpop.permute.xlu0 %3096
    %3099 = vset.pattern.permute.xlu0 7
    %3100 = vperm.xlu0 %3099, %v406
    %v3101 = vpop.permute.xlu0 %3100
    %3103 = vset.pattern.permute.xlu0 7
    %3104 = vperm.xlu0 %3103, %v407
    %v3105 = vpop.permute.xlu0 %3104
    %3107 = vset.pattern.permute.xlu0 7
    %3108 = vperm.xlu0 %3107, %v408
    %v3109 = vpop.permute.xlu0 %3108
    %3111 = vset.pattern.permute.xlu0 7
    %3112 = vperm.xlu0 %3111, %v409
    %v3113 = vpop.permute.xlu0 %3112
    %3115 = vset.pattern.permute.xlu0 7
    %3116 = vperm.xlu0 %3115, %v410
    %v3117 = vpop.permute.xlu0 %3116
    %3119 = vset.pattern.permute.xlu0 7
    %3120 = vperm.xlu0 %3119, %v411
    %v3121 = vpop.permute.xlu0 %3120
    %3123 = vset.pattern.permute.xlu0 7
    %3124 = vperm.xlu0 %3123, %v412
    %v3125 = vpop.permute.xlu0 %3124
    %3127 = vset.pattern.permute.xlu0 7
    %3128 = vperm.xlu0 %3127, %v413
    %v3129 = vpop.permute.xlu0 %3128
    %3131 = vset.pattern.permute.xlu0 7
    %3132 = vperm.xlu0 %3131, %v414
    %v3133 = vpop.permute.xlu0 %3132
    %3135 = vset.pattern.permute.xlu0 7
    %3136 = vperm.xlu0 %3135, %v415
    %v3137 = vpop.permute.xlu0 %3136
    %3139 = vset.pattern.permute.xlu0 7
    %3140 = vperm.xlu0 %3139, %v416
    %v3141 = vpop.permute.xlu0 %3140
    %3143 = vset.pattern.permute.xlu0 7
    %3144 = vperm.xlu0 %3143, %v417
    %v3145 = vpop.permute.xlu0 %3144
    %3147 = vset.pattern.permute.xlu0 7
    %3148 = vperm.xlu0 %3147, %v418
    %v3149 = vpop.permute.xlu0 %3148
    %3151 = vset.pattern.permute.xlu0 7
    %3152 = vperm.xlu0 %3151, %v419
    %v3153 = vpop.permute.xlu0 %3152
    %3155 = vset.pattern.permute.xlu0 7
    %3156 = vperm.xlu0 %3155, %v420
    %v3157 = vpop.permute.xlu0 %3156
    %3159 = vset.pattern.permute.xlu0 7
    %3160 = vperm.xlu0 %3159, %v421
    %v3161 = vpop.permute.xlu0 %3160
    %3163 = vset.pattern.permute.xlu0 7
    %3164 = vperm.xlu0 %3163, %v422
    %v3165 = vpop.permute.xlu0 %3164
    %3167 = vset.pattern.permute.xlu0 7
    %3168 = vperm.xlu0 %3167, %v423
    %v3169 = vpop.permute.xlu0 %3168
    %v3171 = vmul.f32 %v3045, %v638
    %v3172 = vmul.f32 %v3049, %v644
    %v3173 = vmul.f32 %v3053, %v650
    %v3174 = vmul.f32 %v3057, %v656
    %v3175 = vmul.f32 %v3061, %v662
    %v3176 = vmul.f32 %v3065, %v668
    %v3177 = vmul.f32 %v3069, %v674
    %v3178 = vmul.f32 %v3073, %v680
    %v3179 = vmul.f32 %v3077, %v686
    %v3180 = vmul.f32 %v3081, %v692
    %v3181 = vmul.f32 %v3085, %v698
    %v3182 = vmul.f32 %v3089, %v704
    %v3183 = vmul.f32 %v3093, %v710
    %v3184 = vmul.f32 %v3097, %v716
    %v3185 = vmul.f32 %v3101, %v722
    %v3186 = vmul.f32 %v3105, %v728
    %v3187 = vmul.f32 %v3109, %v734
    %v3188 = vmul.f32 %v3113, %v740
    %v3189 = vmul.f32 %v3117, %v746
    %v3190 = vmul.f32 %v3121, %v752
    %v3191 = vmul.f32 %v3125, %v758
    %v3192 = vmul.f32 %v3129, %v764
    %v3193 = vmul.f32 %v3133, %v770
    %v3194 = vmul.f32 %v3137, %v776
    %v3195 = vmul.f32 %v3141, %v782
    %v3196 = vmul.f32 %v3145, %v788
    %v3197 = vmul.f32 %v3149, %v794
    %v3198 = vmul.f32 %v3153, %v800
    %v3199 = vmul.f32 %v3157, %v806
    %v3200 = vmul.f32 %v3161, %v812
    %v3201 = vmul.f32 %v3165, %v818
    %v3202 = vmul.f32 %v3169, %v824
    %3235 = vrot.lane.b32.xlu0 %v3171, 32
    %v3236 = vpop.permute.xlu0 %3235
    %3237 = vrot.lane.b32.xlu0 %v3172, 32
    %v3238 = vpop.permute.xlu0 %3237
    %3239 = vrot.lane.b32.xlu0 %v3173, 32
    %v3240 = vpop.permute.xlu0 %3239
    %3241 = vrot.lane.b32.xlu0 %v3174, 32
    %v3242 = vpop.permute.xlu0 %3241
    %3243 = vrot.lane.b32.xlu0 %v3175, 32
    %v3244 = vpop.permute.xlu0 %3243
    %3245 = vrot.lane.b32.xlu0 %v3176, 32
    %v3246 = vpop.permute.xlu0 %3245
    %3247 = vrot.lane.b32.xlu0 %v3177, 32
    %v3248 = vpop.permute.xlu0 %3247
    %3249 = vrot.lane.b32.xlu0 %v3178, 32
    %v3250 = vpop.permute.xlu0 %3249
    %3251 = vrot.lane.b32.xlu0 %v3179, 32
    %v3252 = vpop.permute.xlu0 %3251
    %3253 = vrot.lane.b32.xlu0 %v3180, 32
    %v3254 = vpop.permute.xlu0 %3253
    %3255 = vrot.lane.b32.xlu0 %v3181, 32
    %v3256 = vpop.permute.xlu0 %3255
    %3257 = vrot.lane.b32.xlu0 %v3182, 32
    %v3258 = vpop.permute.xlu0 %3257
    %3259 = vrot.lane.b32.xlu0 %v3183, 32
    %v3260 = vpop.permute.xlu0 %3259
    %3261 = vrot.lane.b32.xlu0 %v3184, 32
    %v3262 = vpop.permute.xlu0 %3261
    %3263 = vrot.lane.b32.xlu0 %v3185, 32
    %v3264 = vpop.permute.xlu0 %3263
    %3265 = vrot.lane.b32.xlu0 %v3186, 32
    %v3266 = vpop.permute.xlu0 %3265
    %3267 = vrot.lane.b32.xlu0 %v3187, 32
    %v3268 = vpop.permute.xlu0 %3267
    %3269 = vrot.lane.b32.xlu0 %v3188, 32
    %v3270 = vpop.permute.xlu0 %3269
    %3271 = vrot.lane.b32.xlu0 %v3189, 32
    %v3272 = vpop.permute.xlu0 %3271
    %3273 = vrot.lane.b32.xlu0 %v3190, 32
    %v3274 = vpop.permute.xlu0 %3273
    %3275 = vrot.lane.b32.xlu0 %v3191, 32
    %v3276 = vpop.permute.xlu0 %3275
    %3277 = vrot.lane.b32.xlu0 %v3192, 32
    %v3278 = vpop.permute.xlu0 %3277
    %3279 = vrot.lane.b32.xlu0 %v3193, 32
    %v3280 = vpop.permute.xlu0 %3279
    %3281 = vrot.lane.b32.xlu0 %v3194, 32
    %v3282 = vpop.permute.xlu0 %3281
    %3283 = vrot.lane.b32.xlu0 %v3195, 32
    %v3284 = vpop.permute.xlu0 %3283
    %3285 = vrot.lane.b32.xlu0 %v3196, 32
    %v3286 = vpop.permute.xlu0 %3285
    %3287 = vrot.lane.b32.xlu0 %v3197, 32
    %v3288 = vpop.permute.xlu0 %3287
    %3289 = vrot.lane.b32.xlu0 %v3198, 32
    %v3290 = vpop.permute.xlu0 %3289
    %3291 = vrot.lane.b32.xlu0 %v3199, 32
    %v3292 = vpop.permute.xlu0 %3291
    %3293 = vrot.lane.b32.xlu0 %v3200, 32
    %v3294 = vpop.permute.xlu0 %3293
    %3295 = vrot.lane.b32.xlu0 %v3201, 32
    %v3296 = vpop.permute.xlu0 %3295
    %3297 = vrot.lane.b32.xlu0 %v3202, 32
    %v3298 = vpop.permute.xlu0 %3297
    %v3331 = vadd.f32 %v3011, %v3236
    %v3332 = vadd.f32 %v3012, %v3238
    %v3333 = vadd.f32 %v3013, %v3240
    %v3334 = vadd.f32 %v3014, %v3242
    %v3335 = vadd.f32 %v3015, %v3244
    %v3336 = vadd.f32 %v3016, %v3246
    %v3337 = vadd.f32 %v3017, %v3248
    %v3338 = vadd.f32 %v3018, %v3250
    %v3339 = vadd.f32 %v3019, %v3252
    %v3340 = vadd.f32 %v3020, %v3254
    %v3341 = vadd.f32 %v3021, %v3256
    %v3342 = vadd.f32 %v3022, %v3258
    %v3343 = vadd.f32 %v3023, %v3260
    %v3344 = vadd.f32 %v3024, %v3262
    %v3345 = vadd.f32 %v3025, %v3264
    %v3346 = vadd.f32 %v3026, %v3266
    %v3347 = vadd.f32 %v3027, %v3268
    %v3348 = vadd.f32 %v3028, %v3270
    %v3349 = vadd.f32 %v3029, %v3272
    %v3350 = vadd.f32 %v3030, %v3274
    %v3351 = vadd.f32 %v3031, %v3276
    %v3352 = vadd.f32 %v3032, %v3278
    %v3353 = vadd.f32 %v3033, %v3280
    %v3354 = vadd.f32 %v3034, %v3282
    %v3355 = vadd.f32 %v3035, %v3284
    %v3356 = vadd.f32 %v3036, %v3286
    %v3357 = vadd.f32 %v3037, %v3288
    %v3358 = vadd.f32 %v3038, %v3290
    %v3359 = vadd.f32 %v3039, %v3292
    %v3360 = vadd.f32 %v3040, %v3294
    %v3361 = vadd.f32 %v3041, %v3296
    %v3362 = vadd.f32 %v3042, %v3298
    %v3363 = vld [vmem:[%s7] sm:$0xff]
    %v3364 = vld [vmem:[%s6] sm:$0xff]
    %v3365 = vld [vmem:[%s6 + $0x8] sm:$0xff]
    %3366 = vmatprep.subr.mxu0 0.0
    %3367 = vmatpush1.msra.mxu0 %v3331
    %3368 = vmatprep.subr.mxu0 0.0
    %3369 = vmatpush1.msra.mxu0 %v3332
    %3370 = vmatprep.subr.mxu0 0.0
    %3371 = vmatpush1.msra.mxu0 %v3333
    %3372 = vmatprep.subr.mxu0 0.0
    %3373 = vmatpush1.msra.mxu0 %v3334
    %3374 = vmatprep.subr.mxu0 0.0
    %3375 = vmatpush1.msra.mxu0 %v3335
    %3376 = vmatprep.subr.mxu0 0.0
    %3377 = vmatpush1.msra.mxu0 %v3336
    %3378 = vmatprep.subr.mxu0 0.0
    %3379 = vmatpush1.msra.mxu0 %v3337
    %3380 = vmatprep.subr.mxu0 0.0
    %3381 = vmatpush1.msra.mxu0 %v3338
    %3382 = vmatprep.subr.mxu0 0.0
    %3383 = vmatpush1.msra.mxu0 %v3339
    %3384 = vmatprep.subr.mxu0 0.0
    %3385 = vmatpush1.msra.mxu0 %v3340
    %3386 = vmatprep.subr.mxu0 0.0
    %3387 = vmatpush1.msra.mxu0 %v3341
    %3388 = vmatprep.subr.mxu0 0.0
    %3389 = vmatpush1.msra.mxu0 %v3342
    %3390 = vmatprep.subr.mxu0 0.0
    %3391 = vmatpush1.msra.mxu0 %v3343
    %3392 = vmatprep.subr.mxu0 0.0
    %3393 = vmatpush1.msra.mxu0 %v3344
    %3394 = vmatprep.subr.mxu0 0.0
    %3395 = vmatpush1.msra.mxu0 %v3345
    %3396 = vmatprep.subr.mxu0 0.0
    %3397 = vmatpush1.msra.mxu0 %v3346
    %3398 = vmatprep.subr.mxu0 0.0
    %3399 = vmatpush1.msra.mxu0 %v3347
    %3400 = vmatprep.subr.mxu0 0.0
    %3401 = vmatpush1.msra.mxu0 %v3348
    %3402 = vmatprep.subr.mxu0 0.0
    %3403 = vmatpush1.msra.mxu0 %v3349
    %3404 = vmatprep.subr.mxu0 0.0
    %3405 = vmatpush1.msra.mxu0 %v3350
    %3406 = vmatprep.subr.mxu0 0.0
    %3407 = vmatpush1.msra.mxu0 %v3351
    %3408 = vmatprep.subr.mxu0 0.0
    %3409 = vmatpush1.msra.mxu0 %v3352
    %3410 = vmatprep.subr.mxu0 0.0
    %3411 = vmatpush1.msra.mxu0 %v3353
    %3412 = vmatprep.subr.mxu0 0.0
    %3413 = vmatpush1.msra.mxu0 %v3354
    %3414 = vmatprep.subr.mxu0 0.0
    %3415 = vmatpush1.msra.mxu0 %v3355
    %3416 = vmatprep.subr.mxu0 0.0
    %3417 = vmatpush1.msra.mxu0 %v3356
    %3418 = vmatprep.subr.mxu0 0.0
    %3419 = vmatpush1.msra.mxu0 %v3357
    %3420 = vmatprep.subr.mxu0 0.0
    %3421 = vmatpush1.msra.mxu0 %v3358
    %3422 = vmatprep.subr.mxu0 0.0
    %3423 = vmatpush1.msra.mxu0 %v3359
    %3424 = vmatprep.subr.mxu0 0.0
    %3425 = vmatpush1.msra.mxu0 %v3360
    %3426 = vmatprep.subr.mxu0 0.0
    %3427 = vmatpush1.msra.mxu0 %v3361
    %3428 = vmatprep.subr.mxu0 0.0
    %3429 = vmatpush1.msra.mxu0 %v3362
    %3430 = vmatprep.mubr.f32.mxu0 %v3365
    %3431 = vmatmul.mubr.f32.gmra.mrb[0].mxu0 %v3364
    %v3432 = vpop.f32.mrb[0].mxu0
    %v3433 = vadd.f32 0.0, %v3432
    %v3434 = vpop.f32.mrb[0].mxu0
    %3435 = vdwg.mxu0
    %v3436 = vadd.f32 %v3363, %v3433
    %vm3437 = vcmask 261120
    %3438 = vst.msk [vmem:[#allocation2] sm:$0xff] %vm3437, %v3436
    // Predicated region
    $region34: #{tpu_custom_call.1} parent=1 // pred_check
      _
    $region35: #{tpu_custom_call.1} parent=1 // pred_check_branch
      %3440 = sbr.rel (0) target = $region37
    $region36: #{tpu_custom_call.1} parent=1 // pred_region
      %s3442 = ssub.s32 128, 128
      %3443 = vsyncadd [#allocation3], %s3442
      %s3445 = sshll.u32 [#allocation2], 4
      %s3446 = int_to_ptr.vmem [resolvable:$true] %s3445
      %3448 = dma.vmem_to_hbm [thread:$0]  %s3446, 128, %s8, [#allocation3]
    $region37: #{tpu_custom_call.1} parent=1 // pred_fallthru
      _
    // Predicated region
    $region38: #{tpu_custom_call.1} parent=1 // pred_check
      _
    $region39: #{tpu_custom_call.1} parent=1 // pred_check_branch
      %3450 = sbr.rel (0) target = $region41
    $region40: #{tpu_custom_call.1} parent=1 // pred_region
      %3451 = dma.done [#allocation3], 128
    $region41: #{tpu_custom_call.1} parent=1 // pred_fallthru
      _
    %3452 = vsyncpa [#allocation3], 1

</llo_original>
